<compile_context>
chip_gen: v6e
topology: v6e:2x2x1
jax: 0.10.0
libtpu: 0.0.40
codegen_flags: <defaults>
</compile_context>

<pallas_src>
import functools

import jax
import jax.numpy as jnp
from jax import lax
from jax.experimental import pallas as pl
from jax.experimental.pallas import tpu as pltpu

IN_FEATURES = 30   # breast-cancer dataset feature count (X_train.shape[1])
HIDDEN = 16
OUT = 1


def _mlp_kernel(x_ref, w1_ref, b1_ref, w2_ref, b2_ref, w3_ref, b3_ref, o_ref,
                *, x_transposed):
    # Weights in PyTorch nn.Linear layout (out, in); biases (out, 1).
    # All compute in f32 regardless of the streaming dtype of x / weights.
    xv = x_ref[...].astype(jnp.float32)
    w1 = w1_ref[...].astype(jnp.float32); b1 = b1_ref[...].astype(jnp.float32)
    w2 = w2_ref[...].astype(jnp.float32); b2 = b2_ref[...].astype(jnp.float32)
    w3 = w3_ref[...].astype(jnp.float32); b3 = b3_ref[...].astype(jnp.float32)

    if x_transposed:
        # x tile is already (F, TB): plain matmul, batch in lanes, no XLU transpose.
        h1t = jnp.dot(w1, xv, preferred_element_type=jnp.float32)            # (H, TB)
    else:
        # x tile is (TB, F): contract both minor dims -> (H, TB), batch in lanes.
        h1t = lax.dot_general(w1, xv, (((1,), (1,)), ((), ())),
                              preferred_element_type=jnp.float32)             # (H, TB)
    h1t = jnp.maximum(h1t + b1, 0.0)

    h2t = jnp.dot(w2, h1t, preferred_element_type=jnp.float32)                # (H, TB)
    h2t = jnp.maximum(h2t + b2, 0.0)

    zt = jnp.dot(w3, h2t, preferred_element_type=jnp.float32) + b3            # (1, TB)
    o_ref[...] = jax.nn.sigmoid(zt).astype(o_ref.dtype)                       # lane-dense


def _vmem_bytes():
    try:
        return int(pltpu.get_tpu_info().vmem_capacity_bytes)
    except Exception:
        return 64 * 1024 * 1024  # conservative: v7x per-TC VMEM


def _default_block_rows(x_transposed):
    """Generation-aware batch tile: spend ~1/4 of physical VMEM on the
    double-buffered x stream (leaves headroom for the 2nd TC on v7x and for
    weight/output buffers)."""
    vmem = _vmem_bytes()
    # Per-row VMEM cost of the x tile:
    #   (TB, 30): 30 lanes pad to 128  -> 128 * 4 B/row
    #   (30, TB): 30 sublanes pad to 32 ->  32 * 4 B/row  (4x cheaper)
    per_row = (32 * 4) if x_transposed else (128 * 4)
    tb = (vmem // 4) // (2 * per_row)                  # 2 = double buffering
    return max(1024, min(32768, (tb // 128) * 128))    # v7x -> 16384, v5e/v6e -> 32768


def mlp_forward(x, params, *, block_rows=None, x_transposed=False, interpret=False):
    """Fused MLP forward.

    x: (B, IN_FEATURES) float array (f32 or bf16), or (IN_FEATURES, B) when
       x_transposed=True (fast path for producers that can emit that layout).
    params: PyTorch layout, W (out, in), b (out, 1).
    Returns (B, 1) float32 probabilities.
    """
    w1, b1, w2, b2, w3, b3 = params
    if x_transposed:
        F, B = x.shape
    else:
        B, F = x.shape
    assert F == w1.shape[1]

    if block_rows is None:
        block_rows = _default_block_rows(x_transposed)
    # Lane-dense tile: multiple of 128, never bigger than the (rounded-up) batch.
    tb = max(128, min((int(block_rows) // 128) * 128, pl.cdiv(B, 128) * 128))
    num_tiles = pl.cdiv(B, tb)   # ragged last block handled by Pallas; no wrapper pad

    if x_transposed:
        # Lane-dense DMA destination; layer 1 is a plain matmul.
        x_spec = pl.BlockSpec((F, tb), lambda i: (0, i))
        x_row_bytes = 32 * 4
    else:
        x_spec = pl.BlockSpec((tb, F), lambda i: (i, 0))
        x_row_bytes = 128 * 4
    # (If a trace shows exposed DMA, pass pipeline_mode=pl.Buffered(3) above and
    #  grow vmem_limit_bytes accordingly.)

    x_buf_bytes = 2 * tb * x_row_bytes
    vmem_limit = int(min(_vmem_bytes() - (8 << 20), x_buf_bytes + (8 << 20)))

    kernel = functools.partial(_mlp_kernel, x_transposed=x_transposed)

    out_row = pl.pallas_call(
        kernel,
        out_shape=jax.ShapeDtypeStruct((1, B), jnp.float32),
        grid_spec=pltpu.PrefetchScalarGridSpec(
            num_scalar_prefetch=0,
            grid=(num_tiles,),
            in_specs=[
                # x tile: pipelined / double-buffered across the batch grid.
                x_spec,
                # Weights & biases: constant block index -> resident in VMEM,
                # no per-step re-DMA.
                pl.BlockSpec((HIDDEN, F), lambda i: (0, 0)),
                pl.BlockSpec((HIDDEN, 1), lambda i: (0, 0)),
                pl.BlockSpec((HIDDEN, HIDDEN), lambda i: (0, 0)),
                pl.BlockSpec((HIDDEN, 1), lambda i: (0, 0)),
                pl.BlockSpec((OUT, HIDDEN), lambda i: (0, 0)),
                pl.BlockSpec((OUT, 1), lambda i: (0, 0)),
            ],
            # Lane-dense output: each step writes a (1, tb) slab of the (1, B) row;
            # the ragged last block is masked by Pallas.
            out_specs=pl.BlockSpec((1, tb), lambda i: (0, i)),
        ),
        compiler_params=pltpu.CompilerParams(
            # Splits the batch grid across both TensorCores on v7x; no-op v5e/v6e.
            dimension_semantics=("parallel",),
            vmem_limit_bytes=vmem_limit,
        ),
        interpret=interpret,
    )(x, w1, b1, w2, b2, w3, b3)

    # (1, B) -> (B, 1): tiny 4 B/row copy, negligible.
    return jnp.reshape(out_row, (B, 1))


def init_params(key):
    """PyTorch nn.Linear init: U(-1/sqrt(fan_in), 1/sqrt(fan_in)), (out, in) layout."""
    def linear(key, fan_in, fan_out):
        kw, kb = jax.random.split(key)
        bound = 1.0 / jnp.sqrt(float(fan_in))
        w = jax.random.uniform(kw, (fan_out, fan_in), jnp.float32, -bound, bound)
        b = jax.random.uniform(kb, (fan_out, 1), jnp.float32, -bound, bound)
        return w, b

    k1, k2, k3 = jax.random.split(key, 3)
    w1, b1 = linear(k1, IN_FEATURES, HIDDEN)
    w2, b2 = linear(k2, HIDDEN, HIDDEN)
    w3, b3 = linear(k3, HIDDEN, OUT)
    return w1, b1, w2, b2, w3, b3


def mlp_reference(x, params):
    w1, b1, w2, b2, w3, b3 = params
    h1 = jnp.maximum(x @ w1.T + b1[:, 0], 0.0)
    h2 = jnp.maximum(h1 @ w2.T + b2[:, 0], 0.0)
    return jax.nn.sigmoid(h2 @ w3.T + b3[:, 0])


if __name__ == "__main__":
    key = jax.random.PRNGKey(0)
    kx, kp = jax.random.split(key)

    batch = 1000  # deliberately not tile-aligned: exercises the ragged last block
    x = jax.random.normal(kx, (batch, IN_FEATURES), jnp.float32)
    params = init_params(kp)
    ref = mlp_reference(x, params)

    # 1) Default (generation-tuned) tile, f32 streaming.
    out = jax.block_until_ready(mlp_forward(x, params))
    assert out.shape == (batch, OUT)
    assert jnp.allclose(out, ref, atol=1e-5, rtol=1e-5), float(jnp.max(jnp.abs(out - ref)))

    # 2) Small tile purely to exercise multi-step pipelining + the ragged last block
    #    (correctness check only; perf runs should use the default tile).
    out_small = jax.block_until_ready(mlp_forward(x, params, block_rows=512))
    assert jnp.allclose(out_small, ref, atol=1e-5, rtol=1e-5)

    # 3) Transposed-x fast path (producer supplies (F, B); here we transpose only
    #    to validate the code path).
    out_t = jax.block_until_ready(mlp_forward(x.T, params, x_transposed=True))
    assert jnp.allclose(out_t, ref, atol=1e-5, rtol=1e-5)

    # 4) bf16 streaming of x (halves HBM traffic on v6e/v7x); compute stays f32.
    out_bf16 = jax.block_until_ready(mlp_forward(x.astype(jnp.bfloat16), params))
    assert jnp.allclose(out_bf16, ref, atol=2e-2, rtol=2e-2)

    print("KERNEL_OK")
</pallas_src>

<mosaic_0001>
module attributes {stable_mosaic.version = 11 : i64} {
  func.func @_mlp_kernel(%arg0: i32, %arg1: memref<1024x30xf32, #tpu.memory_space<vmem>>, %arg2: memref<16x30xf32, #tpu.memory_space<vmem>>, %arg3: memref<16x1xf32, #tpu.memory_space<vmem>>, %arg4: memref<16x16xf32, #tpu.memory_space<vmem>>, %arg5: memref<16x1xf32, #tpu.memory_space<vmem>>, %arg6: memref<1x16xf32, #tpu.memory_space<vmem>>, %arg7: memref<1x1xf32, #tpu.memory_space<vmem>>, %arg8: memref<1x1024xf32, #tpu.memory_space<vmem>>) attributes {dimension_semantics = [#tpu.dimension_semantics<parallel>], iteration_bounds = array<i64: 1>, scalar_prefetch = 0 : i64, scratch_operands = 0 : i64, tpu.core_type = #tpu.core_type<tc>, window_params = [{transform_indices = @transform_0, window_bounds = array<i64: 1024, 30>}, {pipeline_mode = #tpu.pipeline_mode<synchronous>, transform_indices = @transform_1, window_bounds = array<i64: 16, 30>}, {pipeline_mode = #tpu.pipeline_mode<synchronous>, transform_indices = @transform_2, window_bounds = array<i64: 16, 1>}, {pipeline_mode = #tpu.pipeline_mode<synchronous>, transform_indices = @transform_3, window_bounds = array<i64: 16, 16>}, {pipeline_mode = #tpu.pipeline_mode<synchronous>, transform_indices = @transform_4, window_bounds = array<i64: 16, 1>}, {pipeline_mode = #tpu.pipeline_mode<synchronous>, transform_indices = @transform_5, window_bounds = array<i64: 1, 16>}, {pipeline_mode = #tpu.pipeline_mode<synchronous>, transform_indices = @transform_6, window_bounds = array<i64: 1, 1>}, {transform_indices = @transform_7, window_bounds = array<i64: 1, 1024>}]} {
    %c0 = arith.constant 0 : index
    %c0_0 = arith.constant 0 : index
    %0 = vector.load %arg1[%c0, %c0_0] : memref<1024x30xf32, #tpu.memory_space<vmem>>, vector<1024x30xf32>
    %c0_1 = arith.constant 0 : index
    %c0_2 = arith.constant 0 : index
    %1 = vector.load %arg2[%c0_1, %c0_2] : memref<16x30xf32, #tpu.memory_space<vmem>>, vector<16x30xf32>
    %c0_3 = arith.constant 0 : index
    %c0_4 = arith.constant 0 : index
    %2 = vector.load %arg3[%c0_3, %c0_4] : memref<16x1xf32, #tpu.memory_space<vmem>>, vector<16x1xf32>
    %c0_5 = arith.constant 0 : index
    %c0_6 = arith.constant 0 : index
    %3 = vector.load %arg4[%c0_5, %c0_6] : memref<16x16xf32, #tpu.memory_space<vmem>>, vector<16x16xf32>
    %c0_7 = arith.constant 0 : index
    %c0_8 = arith.constant 0 : index
    %4 = vector.load %arg5[%c0_7, %c0_8] : memref<16x1xf32, #tpu.memory_space<vmem>>, vector<16x1xf32>
    %c0_9 = arith.constant 0 : index
    %c0_10 = arith.constant 0 : index
    %5 = vector.load %arg6[%c0_9, %c0_10] : memref<1x16xf32, #tpu.memory_space<vmem>>, vector<1x16xf32>
    %c0_11 = arith.constant 0 : index
    %c0_12 = arith.constant 0 : index
    %6 = vector.load %arg7[%c0_11, %c0_12] : memref<1x1xf32, #tpu.memory_space<vmem>>, vector<1x1xf32>
    %cst = arith.constant dense<0.000000e+00> : vector<16x1024xf32>
    %7 = tpu.matmul %1, %0, %cst {dimension_numbers = #tpu.dot_dimension_numbers<[1], [1], [0], [0], [0, 0, 1, 0], [], []>} : vector<16x30xf32>, vector<1024x30xf32>, vector<16x1024xf32> -> vector<16x1024xf32>
    %8 = vector.broadcast %2 : vector<16x1xf32> to vector<16x1024xf32>
    %9 = arith.addf %7, %8 : vector<16x1024xf32>
    %cst_13 = arith.constant 0.000000e+00 : f32
    %10 = vector.broadcast %cst_13 : f32 to vector<16x1024xf32>
    %11 = arith.maximumf %9, %10 : vector<16x1024xf32>
    %cst_14 = arith.constant dense<0.000000e+00> : vector<16x1024xf32>
    %12 = tpu.matmul %3, %11, %cst_14 {dimension_numbers = #tpu.dot_dimension_numbers<[1], [0], [0], [1], [0, 0, 1, 1], [], []>} : vector<16x16xf32>, vector<16x1024xf32>, vector<16x1024xf32> -> vector<16x1024xf32>
    %13 = vector.broadcast %4 : vector<16x1xf32> to vector<16x1024xf32>
    %14 = arith.addf %12, %13 : vector<16x1024xf32>
    %cst_15 = arith.constant 0.000000e+00 : f32
    %15 = vector.broadcast %cst_15 : f32 to vector<16x1024xf32>
    %16 = arith.maximumf %14, %15 : vector<16x1024xf32>
    %cst_16 = arith.constant dense<0.000000e+00> : vector<1x1024xf32>
    %17 = tpu.matmul %5, %16, %cst_16 {dimension_numbers = #tpu.dot_dimension_numbers<[1], [0], [0], [1], [0, 0, 1, 1], [], []>} : vector<1x16xf32>, vector<16x1024xf32>, vector<1x1024xf32> -> vector<1x1024xf32>
    %18 = vector.broadcast %6 : vector<1x1xf32> to vector<1x1024xf32>
    %19 = arith.addf %17, %18 : vector<1x1024xf32>
    %20 = arith.negf %19 : vector<1x1024xf32>
    %21 = math.exp %20 : vector<1x1024xf32>
    %cst_17 = arith.constant 1.000000e+00 : f32
    %22 = vector.broadcast %cst_17 : f32 to vector<1x1024xf32>
    %23 = arith.addf %22, %21 : vector<1x1024xf32>
    %24 = arith.divf %22, %23 : vector<1x1024xf32>
    %c0_18 = arith.constant 0 : index
    %c0_19 = arith.constant 0 : index
    %25 = vector.load %arg8[%c0_18, %c0_19] : memref<1x1024xf32, #tpu.memory_space<vmem>>, vector<1x1024xf32>
    tpu.vector_store %arg8[%c0_18, %c0_19], %24 {strides = array<i32>} : memref<1x1024xf32, #tpu.memory_space<vmem>>, vector<1x1024xf32>,
    return
  }
  func.func @transform_0(%arg0: i32) -> (i32, i32) {
    %c0_i32 = arith.constant 0 : i32
    %c0_i32_0 = arith.constant 0 : i32
    return %arg0, %c0_i32 : i32, i32
  }
  func.func @transform_1(%arg0: i32) -> (i32, i32) {
    %c0_i32 = arith.constant 0 : i32
    %c0_i32_0 = arith.constant 0 : i32
    %c0_i32_1 = arith.constant 0 : i32
    return %c0_i32, %c0_i32_0 : i32, i32
  }
  func.func @transform_2(%arg0: i32) -> (i32, i32) {
    %c0_i32 = arith.constant 0 : i32
    %c0_i32_0 = arith.constant 0 : i32
    %c0_i32_1 = arith.constant 0 : i32
    return %c0_i32, %c0_i32_0 : i32, i32
  }
  func.func @transform_3(%arg0: i32) -> (i32, i32) {
    %c0_i32 = arith.constant 0 : i32
    %c0_i32_0 = arith.constant 0 : i32
    %c0_i32_1 = arith.constant 0 : i32
    return %c0_i32, %c0_i32_0 : i32, i32
  }
  func.func @transform_4(%arg0: i32) -> (i32, i32) {
    %c0_i32 = arith.constant 0 : i32
    %c0_i32_0 = arith.constant 0 : i32
    %c0_i32_1 = arith.constant 0 : i32
    return %c0_i32, %c0_i32_0 : i32, i32
  }
  func.func @transform_5(%arg0: i32) -> (i32, i32) {
    %c0_i32 = arith.constant 0 : i32
    %c0_i32_0 = arith.constant 0 : i32
    %c0_i32_1 = arith.constant 0 : i32
    return %c0_i32, %c0_i32_0 : i32, i32
  }
  func.func @transform_6(%arg0: i32) -> (i32, i32) {
    %c0_i32 = arith.constant 0 : i32
    %c0_i32_0 = arith.constant 0 : i32
    %c0_i32_1 = arith.constant 0 : i32
    return %c0_i32, %c0_i32_0 : i32, i32
  }
  func.func @transform_7(%arg0: i32) -> (i32, i32) {
    %c0_i32 = arith.constant 0 : i32
    %c0_i32_0 = arith.constant 0 : i32
    return %c0_i32, %arg0 : i32, i32
  }
}

</mosaic_0001>

<llo_original>
// kernel: tpu_custom_call.1
$region0: #{tpu_custom_call.1}
  #allocation0 [shape = 'u32[]', space=smem, size = 0x4, offset = 0x4, fixed_abs, tag = 'smem constant byte address 0x4 - core index']
  #allocation1 [shape = 'u32[144,128]{1,0:T(1,128)}', space=vmem, size = 0x12000, scoped, tag = 'internal scratch']
  #allocation2 [shape = 'f32[1,1]{1,0:T(1,128)S(1)}', space=vmem, size = 0x200, scoped, tag = 'scoped memory for tpu_custom_call.1']
  %s0 = inlined_call_operand.vmem [shape: f32[1000,30], index: 0, kind: input, shape index: {}]
  %s1 = inlined_call_operand.vmem [shape: f32[16,30], index: 1, kind: input, shape index: {}]
  %s2 = inlined_call_operand.vmem [shape: f32[16,1], index: 2, kind: input, shape index: {}]
  %s3 = inlined_call_operand.vmem [shape: f32[16,16], index: 3, kind: input, shape index: {}]
  %s4 = inlined_call_operand.vmem [shape: f32[16,1], index: 4, kind: input, shape index: {}]
  %s5 = inlined_call_operand.vmem [shape: f32[1,16], index: 5, kind: input, shape index: {}]
  %s6 = inlined_call_operand.<no memory space> [shape: f32[1,1], index: 6, kind: input, shape index: {}]
  %s7 = inlined_call_operand.hbm [shape: f32[1,1000], index: 7, kind: output, shape index: {}]
  %s8 = sld [smem:[#allocation0]]
  $region38: #{tpu_custom_call.1} parent=0
    _
  %s10 = ssub.s32 1, %s8
  %s11 = scalar_select 0, %s10, %s8
  %v12 = vstv %s6
  %13 = vst [vmem:[#allocation2] sm:$0x1] %v12
  $region1: #{tpu_custom_call.1} parent=0
    #allocation3 [shape = 'u8[4096]{0}', space=vmem, size = 0x1000, scoped, tag = 'output window, operand 0, single buffered']
    #allocation4 [shape = 's32[1]{0}', space=sflag, size = 0x4, scoped, tag = 'scoped memory for tpu_custom_call.1']
    %14 = vsyncpa [#allocation4], 0
    // Predicated region
    $region2: #{tpu_custom_call.1} parent=1 // pred_check
      _
    $region3: #{tpu_custom_call.1} parent=1 // pred_check_branch
      %16 = sbr.rel (0) target = $region5
    $region4: #{tpu_custom_call.1} parent=1 // pred_region
      _
    $region5: #{tpu_custom_call.1} parent=1 // pred_fallthru
      _
    // Predicated region
    $region6: #{tpu_custom_call.1} parent=1 // pred_check
      _
    $region7: #{tpu_custom_call.1} parent=1 // pred_check_branch
      %18 = sbr.rel (0) target = $region9
    $region8: #{tpu_custom_call.1} parent=1 // pred_region
      _
    $region9: #{tpu_custom_call.1} parent=1 // pred_fallthru
      _
    // Predicated region
    $region10: #{tpu_custom_call.1} parent=1 // pred_check
      _
    $region11: #{tpu_custom_call.1} parent=1 // pred_check_branch
      %20 = sbr.rel (0) target = $region13
    $region12: #{tpu_custom_call.1} parent=1 // pred_region
      _
    $region13: #{tpu_custom_call.1} parent=1 // pred_fallthru
      _
    // Predicated region
    $region14: #{tpu_custom_call.1} parent=1 // pred_check
      _
    $region15: #{tpu_custom_call.1} parent=1 // pred_check_branch
      %22 = sbr.rel (0) target = $region17
    $region16: #{tpu_custom_call.1} parent=1 // pred_region
      _
    $region17: #{tpu_custom_call.1} parent=1 // pred_fallthru
      _
    // Predicated region
    $region18: #{tpu_custom_call.1} parent=1 // pred_check
      _
    $region19: #{tpu_custom_call.1} parent=1 // pred_check_branch
      %24 = sbr.rel (0) target = $region21
    $region20: #{tpu_custom_call.1} parent=1 // pred_region
      _
    $region21: #{tpu_custom_call.1} parent=1 // pred_fallthru
      _
    // Predicated region
    $region22: #{tpu_custom_call.1} parent=1 // pred_check
      _
    $region23: #{tpu_custom_call.1} parent=1 // pred_check_branch
      %26 = sbr.rel (0) target = $region25
    $region24: #{tpu_custom_call.1} parent=1 // pred_region
      _
    $region25: #{tpu_custom_call.1} parent=1 // pred_fallthru
      _
    // Predicated region
    $region26: #{tpu_custom_call.1} parent=1 // pred_check
      _
    $region27: #{tpu_custom_call.1} parent=1 // pred_check_branch
      %28 = sbr.rel (0) target = $region29
    $region28: #{tpu_custom_call.1} parent=1 // pred_region
      _
    $region29: #{tpu_custom_call.1} parent=1 // pred_fallthru
      _
    %v29 = vld [vmem:[%s0] sm:$0xff]
    %v30 = vld [vmem:[%s0 + $0x8] sm:$0xff]
    %v31 = vld [vmem:[%s0 + $0x10] sm:$0xff]
    %v32 = vld [vmem:[%s0 + $0x18] sm:$0xff]
    %v33 = vld [vmem:[%s0 + $0x20] sm:$0xff]
    %v34 = vld [vmem:[%s0 + $0x28] sm:$0xff]
    %v35 = vld [vmem:[%s0 + $0x30] sm:$0xff]
    %v36 = vld [vmem:[%s0 + $0x38] sm:$0xff]
    %v37 = vld [vmem:[%s0 + $0x40] sm:$0xff]
    %v38 = vld [vmem:[%s0 + $0x48] sm:$0xff]
    %v39 = vld [vmem:[%s0 + $0x50] sm:$0xff]
    %v40 = vld [vmem:[%s0 + $0x58] sm:$0xff]
    %v41 = vld [vmem:[%s0 + $0x60] sm:$0xff]
    %v42 = vld [vmem:[%s0 + $0x68] sm:$0xff]
    %v43 = vld [vmem:[%s0 + $0x70] sm:$0xff]
    %v44 = vld [vmem:[%s0 + $0x78] sm:$0xff]
    %v45 = vld [vmem:[%s0 + $0x80] sm:$0xff]
    %v46 = vld [vmem:[%s0 + $0x88] sm:$0xff]
    %v47 = vld [vmem:[%s0 + $0x90] sm:$0xff]
    %v48 = vld [vmem:[%s0 + $0x98] sm:$0xff]
    %v49 = vld [vmem:[%s0 + $0xa0] sm:$0xff]
    %v50 = vld [vmem:[%s0 + $0xa8] sm:$0xff]
    %v51 = vld [vmem:[%s0 + $0xb0] sm:$0xff]
    %v52 = vld [vmem:[%s0 + $0xb8] sm:$0xff]
    %v53 = vld [vmem:[%s0 + $0xc0] sm:$0xff]
    %v54 = vld [vmem:[%s0 + $0xc8] sm:$0xff]
    %v55 = vld [vmem:[%s0 + $0xd0] sm:$0xff]
    %v56 = vld [vmem:[%s0 + $0xd8] sm:$0xff]
    %v57 = vld [vmem:[%s0 + $0xe0] sm:$0xff]
    %v58 = vld [vmem:[%s0 + $0xe8] sm:$0xff]
    %v59 = vld [vmem:[%s0 + $0xf0] sm:$0xff]
    %v60 = vld [vmem:[%s0 + $0xf8] sm:$0xff]
    %v61 = vld [vmem:[%s0 + $0x100] sm:$0xff]
    %v62 = vld [vmem:[%s0 + $0x108] sm:$0xff]
    %v63 = vld [vmem:[%s0 + $0x110] sm:$0xff]
    %v64 = vld [vmem:[%s0 + $0x118] sm:$0xff]
    %v65 = vld [vmem:[%s0 + $0x120] sm:$0xff]
    %v66 = vld [vmem:[%s0 + $0x128] sm:$0xff]
    %v67 = vld [vmem:[%s0 + $0x130] sm:$0xff]
    %v68 = vld [vmem:[%s0 + $0x138] sm:$0xff]
    %v69 = vld [vmem:[%s0 + $0x140] sm:$0xff]
    %v70 = vld [vmem:[%s0 + $0x148] sm:$0xff]
    %v71 = vld [vmem:[%s0 + $0x150] sm:$0xff]
    %v72 = vld [vmem:[%s0 + $0x158] sm:$0xff]
    %v73 = vld [vmem:[%s0 + $0x160] sm:$0xff]
    %v74 = vld [vmem:[%s0 + $0x168] sm:$0xff]
    %v75 = vld [vmem:[%s0 + $0x170] sm:$0xff]
    %v76 = vld [vmem:[%s0 + $0x178] sm:$0xff]
    %v77 = vld [vmem:[%s0 + $0x180] sm:$0xff]
    %v78 = vld [vmem:[%s0 + $0x188] sm:$0xff]
    %v79 = vld [vmem:[%s0 + $0x190] sm:$0xff]
    %v80 = vld [vmem:[%s0 + $0x198] sm:$0xff]
    %v81 = vld [vmem:[%s0 + $0x1a0] sm:$0xff]
    %v82 = vld [vmem:[%s0 + $0x1a8] sm:$0xff]
    %v83 = vld [vmem:[%s0 + $0x1b0] sm:$0xff]
    %v84 = vld [vmem:[%s0 + $0x1b8] sm:$0xff]
    %v85 = vld [vmem:[%s0 + $0x1c0] sm:$0xff]
    %v86 = vld [vmem:[%s0 + $0x1c8] sm:$0xff]
    %v87 = vld [vmem:[%s0 + $0x1d0] sm:$0xff]
    %v88 = vld [vmem:[%s0 + $0x1d8] sm:$0xff]
    %v89 = vld [vmem:[%s0 + $0x1e0] sm:$0xff]
    %v90 = vld [vmem:[%s0 + $0x1e8] sm:$0xff]
    %v91 = vld [vmem:[%s0 + $0x1f0] sm:$0xff]
    %v92 = vld [vmem:[%s0 + $0x1f8] sm:$0xff]
    %v93 = vld [vmem:[%s0 + $0x200] sm:$0xff]
    %v94 = vld [vmem:[%s0 + $0x208] sm:$0xff]
    %v95 = vld [vmem:[%s0 + $0x210] sm:$0xff]
    %v96 = vld [vmem:[%s0 + $0x218] sm:$0xff]
    %v97 = vld [vmem:[%s0 + $0x220] sm:$0xff]
    %v98 = vld [vmem:[%s0 + $0x228] sm:$0xff]
    %v99 = vld [vmem:[%s0 + $0x230] sm:$0xff]
    %v100 = vld [vmem:[%s0 + $0x238] sm:$0xff]
    %v101 = vld [vmem:[%s0 + $0x240] sm:$0xff]
    %v102 = vld [vmem:[%s0 + $0x248] sm:$0xff]
    %v103 = vld [vmem:[%s0 + $0x250] sm:$0xff]
    %v104 = vld [vmem:[%s0 + $0x258] sm:$0xff]
    %v105 = vld [vmem:[%s0 + $0x260] sm:$0xff]
    %v106 = vld [vmem:[%s0 + $0x268] sm:$0xff]
    %v107 = vld [vmem:[%s0 + $0x270] sm:$0xff]
    %v108 = vld [vmem:[%s0 + $0x278] sm:$0xff]
    %v109 = vld [vmem:[%s0 + $0x280] sm:$0xff]
    %v110 = vld [vmem:[%s0 + $0x288] sm:$0xff]
    %v111 = vld [vmem:[%s0 + $0x290] sm:$0xff]
    %v112 = vld [vmem:[%s0 + $0x298] sm:$0xff]
    %v113 = vld [vmem:[%s0 + $0x2a0] sm:$0xff]
    %v114 = vld [vmem:[%s0 + $0x2a8] sm:$0xff]
    %v115 = vld [vmem:[%s0 + $0x2b0] sm:$0xff]
    %v116 = vld [vmem:[%s0 + $0x2b8] sm:$0xff]
    %v117 = vld [vmem:[%s0 + $0x2c0] sm:$0xff]
    %v118 = vld [vmem:[%s0 + $0x2c8] sm:$0xff]
    %v119 = vld [vmem:[%s0 + $0x2d0] sm:$0xff]
    %v120 = vld [vmem:[%s0 + $0x2d8] sm:$0xff]
    %v121 = vld [vmem:[%s0 + $0x2e0] sm:$0xff]
    %v122 = vld [vmem:[%s0 + $0x2e8] sm:$0xff]
    %v123 = vld [vmem:[%s0 + $0x2f0] sm:$0xff]
    %v124 = vld [vmem:[%s0 + $0x2f8] sm:$0xff]
    %v125 = vld [vmem:[%s0 + $0x300] sm:$0xff]
    %v126 = vld [vmem:[%s0 + $0x308] sm:$0xff]
    %v127 = vld [vmem:[%s0 + $0x310] sm:$0xff]
    %v128 = vld [vmem:[%s0 + $0x318] sm:$0xff]
    %v129 = vld [vmem:[%s0 + $0x320] sm:$0xff]
    %v130 = vld [vmem:[%s0 + $0x328] sm:$0xff]
    %v131 = vld [vmem:[%s0 + $0x330] sm:$0xff]
    %v132 = vld [vmem:[%s0 + $0x338] sm:$0xff]
    %v133 = vld [vmem:[%s0 + $0x340] sm:$0xff]
    %v134 = vld [vmem:[%s0 + $0x348] sm:$0xff]
    %v135 = vld [vmem:[%s0 + $0x350] sm:$0xff]
    %v136 = vld [vmem:[%s0 + $0x358] sm:$0xff]
    %v137 = vld [vmem:[%s0 + $0x360] sm:$0xff]
    %v138 = vld [vmem:[%s0 + $0x368] sm:$0xff]
    %v139 = vld [vmem:[%s0 + $0x370] sm:$0xff]
    %v140 = vld [vmem:[%s0 + $0x378] sm:$0xff]
    %v141 = vld [vmem:[%s0 + $0x380] sm:$0xff]
    %v142 = vld [vmem:[%s0 + $0x388] sm:$0xff]
    %v143 = vld [vmem:[%s0 + $0x390] sm:$0xff]
    %v144 = vld [vmem:[%s0 + $0x398] sm:$0xff]
    %v145 = vld [vmem:[%s0 + $0x3a0] sm:$0xff]
    %v146 = vld [vmem:[%s0 + $0x3a8] sm:$0xff]
    %v147 = vld [vmem:[%s0 + $0x3b0] sm:$0xff]
    %v148 = vld [vmem:[%s0 + $0x3b8] sm:$0xff]
    %v149 = vld [vmem:[%s0 + $0x3c0] sm:$0xff]
    %v150 = vld [vmem:[%s0 + $0x3c8] sm:$0xff]
    %v151 = vld [vmem:[%s0 + $0x3d0] sm:$0xff]
    %v152 = vld [vmem:[%s0 + $0x3d8] sm:$0xff]
    %v153 = vld [vmem:[%s0 + $0x3e0] sm:$0xff]
    %v154 = vld [vmem:[%s0 + $0x3e8] sm:$0xff]
    %v155 = vld [vmem:[%s0 + $0x3f0] sm:$0xff]
    %v156 = vld [vmem:[%s0 + $0x3f8] sm:$0xff]
    %v157 = vld [vmem:[%s1] sm:$0xff]
    %v158 = vld [vmem:[%s1 + $0x8] sm:$0xff]
    %v159 = vld [vmem:[%s2] sm:$0xff]
    %v160 = vld [vmem:[%s2 + $0x8] sm:$0xff]
    %v161 = vld [vmem:[%s3] sm:$0xff]
    %v162 = vld [vmem:[%s3 + $0x8] sm:$0xff]
    %v163 = vld [vmem:[%s4] sm:$0xff]
    %v164 = vld [vmem:[%s4 + $0x8] sm:$0xff]
    %v165 = vld [vmem:[%s5] sm:$0x1]
    %v166 = vld [vmem:[#allocation2] sm:$0x1]
    %168 = vset.pattern.permute.xlu0 0
    %169 = vperm.xlu0 %168, %v159
    %v170 = vpop.permute.xlu0 %169
    %173 = vset.pattern.permute.xlu0 0
    %174 = vperm.xlu0 %173, %v160
    %v175 = vpop.permute.xlu0 %174
    %vm177 = vcmask 244736
    %v179 = vsel %vm177, %v157, 0
    %v182 = vsel %vm177, %v158, 0
    %v185 = vsel %vm177, %v29, 0
    %v188 = vsel %vm177, %v30, 0
    %v191 = vsel %vm177, %v31, 0
    %v194 = vsel %vm177, %v32, 0
    %v197 = vsel %vm177, %v33, 0
    %v200 = vsel %vm177, %v34, 0
    %v203 = vsel %vm177, %v35, 0
    %v206 = vsel %vm177, %v36, 0
    %v209 = vsel %vm177, %v37, 0
    %v212 = vsel %vm177, %v38, 0
    %v215 = vsel %vm177, %v39, 0
    %v218 = vsel %vm177, %v40, 0
    %v221 = vsel %vm177, %v41, 0
    %v224 = vsel %vm177, %v42, 0
    %v227 = vsel %vm177, %v43, 0
    %v230 = vsel %vm177, %v44, 0
    %v233 = vsel %vm177, %v45, 0
    %v236 = vsel %vm177, %v46, 0
    %v239 = vsel %vm177, %v47, 0
    %v242 = vsel %vm177, %v48, 0
    %v245 = vsel %vm177, %v49, 0
    %v248 = vsel %vm177, %v50, 0
    %v251 = vsel %vm177, %v51, 0
    %v254 = vsel %vm177, %v52, 0
    %v257 = vsel %vm177, %v53, 0
    %v260 = vsel %vm177, %v54, 0
    %v263 = vsel %vm177, %v55, 0
    %v266 = vsel %vm177, %v56, 0
    %v269 = vsel %vm177, %v57, 0
    %v272 = vsel %vm177, %v58, 0
    %v275 = vsel %vm177, %v59, 0
    %v278 = vsel %vm177, %v60, 0
    %v281 = vsel %vm177, %v61, 0
    %v284 = vsel %vm177, %v62, 0
    %v287 = vsel %vm177, %v63, 0
    %v290 = vsel %vm177, %v64, 0
    %v293 = vsel %vm177, %v65, 0
    %v296 = vsel %vm177, %v66, 0
    %v299 = vsel %vm177, %v67, 0
    %v302 = vsel %vm177, %v68, 0
    %v305 = vsel %vm177, %v69, 0
    %v308 = vsel %vm177, %v70, 0
    %v311 = vsel %vm177, %v71, 0
    %v314 = vsel %vm177, %v72, 0
    %v317 = vsel %vm177, %v73, 0
    %v320 = vsel %vm177, %v74, 0
    %v323 = vsel %vm177, %v75, 0
    %v326 = vsel %vm177, %v76, 0
    %v329 = vsel %vm177, %v77, 0
    %v332 = vsel %vm177, %v78, 0
    %v335 = vsel %vm177, %v79, 0
    %v338 = vsel %vm177, %v80, 0
    %v341 = vsel %vm177, %v81, 0
    %v344 = vsel %vm177, %v82, 0
    %v347 = vsel %vm177, %v83, 0
    %v350 = vsel %vm177, %v84, 0
    %v353 = vsel %vm177, %v85, 0
    %v356 = vsel %vm177, %v86, 0
    %v359 = vsel %vm177, %v87, 0
    %v362 = vsel %vm177, %v88, 0
    %v365 = vsel %vm177, %v89, 0
    %v368 = vsel %vm177, %v90, 0
    %v371 = vsel %vm177, %v91, 0
    %v374 = vsel %vm177, %v92, 0
    %v377 = vsel %vm177, %v93, 0
    %v380 = vsel %vm177, %v94, 0
    %v383 = vsel %vm177, %v95, 0
    %v386 = vsel %vm177, %v96, 0
    %v389 = vsel %vm177, %v97, 0
    %v392 = vsel %vm177, %v98, 0
    %v395 = vsel %vm177, %v99, 0
    %v398 = vsel %vm177, %v100, 0
    %v401 = vsel %vm177, %v101, 0
    %v404 = vsel %vm177, %v102, 0
    %v407 = vsel %vm177, %v103, 0
    %v410 = vsel %vm177, %v104, 0
    %v413 = vsel %vm177, %v105, 0
    %v416 = vsel %vm177, %v106, 0
    %v419 = vsel %vm177, %v107, 0
    %v422 = vsel %vm177, %v108, 0
    %v425 = vsel %vm177, %v109, 0
    %v428 = vsel %vm177, %v110, 0
    %v431 = vsel %vm177, %v111, 0
    %v434 = vsel %vm177, %v112, 0
    %v437 = vsel %vm177, %v113, 0
    %v440 = vsel %vm177, %v114, 0
    %v443 = vsel %vm177, %v115, 0
    %v446 = vsel %vm177, %v116, 0
    %v449 = vsel %vm177, %v117, 0
    %v452 = vsel %vm177, %v118, 0
    %v455 = vsel %vm177, %v119, 0
    %v458 = vsel %vm177, %v120, 0
    %v461 = vsel %vm177, %v121, 0
    %v464 = vsel %vm177, %v122, 0
    %v467 = vsel %vm177, %v123, 0
    %v470 = vsel %vm177, %v124, 0
    %v473 = vsel %vm177, %v125, 0
    %v476 = vsel %vm177, %v126, 0
    %v479 = vsel %vm177, %v127, 0
    %v482 = vsel %vm177, %v128, 0
    %v485 = vsel %vm177, %v129, 0
    %v488 = vsel %vm177, %v130, 0
    %v491 = vsel %vm177, %v131, 0
    %v494 = vsel %vm177, %v132, 0
    %v497 = vsel %vm177, %v133, 0
    %v500 = vsel %vm177, %v134, 0
    %v503 = vsel %vm177, %v135, 0
    %v506 = vsel %vm177, %v136, 0
    %v509 = vsel %vm177, %v137, 0
    %v512 = vsel %vm177, %v138, 0
    %v515 = vsel %vm177, %v139, 0
    %v518 = vsel %vm177, %v140, 0
    %v521 = vsel %vm177, %v141, 0
    %v524 = vsel %vm177, %v142, 0
    %v527 = vsel %vm177, %v143, 0
    %v530 = vsel %vm177, %v144, 0
    %v533 = vsel %vm177, %v145, 0
    %v536 = vsel %vm177, %v146, 0
    %v539 = vsel %vm177, %v147, 0
    %v542 = vsel %vm177, %v148, 0
    %v545 = vsel %vm177, %v149, 0
    %v548 = vsel %vm177, %v150, 0
    %v551 = vsel %vm177, %v151, 0
    %v554 = vsel %vm177, %v152, 0
    %v557 = vsel %vm177, %v153, 0
    %v560 = vsel %vm177, %v154, 0
    %v563 = vsel %vm177, %v155, 0
    %v566 = vsel %vm177, %v156, 0
    %568 = vmatprep.subr.mxu0 0.0
    %569 = vmatpush1.xpose.msra.mxu0 %v230
    %570 = vmatprep.subr.mxu0 0.0
    %571 = vmatpush1.xpose.msra.mxu0 %v227
    %572 = vmatprep.subr.mxu0 0.0
    %573 = vmatpush1.xpose.msra.mxu0 %v224
    %574 = vmatprep.subr.mxu0 0.0
    %575 = vmatpush1.xpose.msra.mxu0 %v221
    %576 = vmatprep.subr.mxu0 0.0
    %577 = vmatpush1.xpose.msra.mxu0 %v218
    %578 = vmatprep.subr.mxu0 0.0
    %579 = vmatpush1.xpose.msra.mxu0 %v215
    %580 = vmatprep.subr.mxu0 0.0
    %581 = vmatpush1.xpose.msra.mxu0 %v212
    %582 = vmatprep.subr.mxu0 0.0
    %583 = vmatpush1.xpose.msra.mxu0 %v209
    %584 = vmatprep.subr.mxu0 0.0
    %585 = vmatpush1.xpose.msra.mxu0 %v206
    %586 = vmatprep.subr.mxu0 0.0
    %587 = vmatpush1.xpose.msra.mxu0 %v203
    %588 = vmatprep.subr.mxu0 0.0
    %589 = vmatpush1.xpose.msra.mxu0 %v200
    %590 = vmatprep.subr.mxu0 0.0
    %591 = vmatpush1.xpose.msra.mxu0 %v197
    %592 = vmatprep.subr.mxu0 0.0
    %593 = vmatpush1.xpose.msra.mxu0 %v194
    %594 = vmatprep.subr.mxu0 0.0
    %595 = vmatpush1.xpose.msra.mxu0 %v191
    %596 = vmatprep.subr.mxu0 0.0
    %597 = vmatpush1.xpose.msra.mxu0 %v188
    %598 = vmatprep.subr.mxu0 0.0
    %599 = vmatpush1.xpose.msra.mxu0 %v185
    %600 = vmatprep.subr.mxu0 0.0
    %601 = vmatpush2.xpose.msra.mxu0 %v278
    %602 = vmatprep.subr.mxu0 0.0
    %603 = vmatpush2.xpose.msra.mxu0 %v275
    %604 = vmatprep.subr.mxu0 0.0
    %605 = vmatpush2.xpose.msra.mxu0 %v272
    %606 = vmatprep.subr.mxu0 0.0
    %607 = vmatpush2.xpose.msra.mxu0 %v269
    %608 = vmatprep.subr.mxu0 0.0
    %609 = vmatpush2.xpose.msra.mxu0 %v266
    %610 = vmatprep.subr.mxu0 0.0
    %611 = vmatpush2.xpose.msra.mxu0 %v263
    %612 = vmatprep.subr.mxu0 0.0
    %613 = vmatpush2.xpose.msra.mxu0 %v260
    %614 = vmatprep.subr.mxu0 0.0
    %615 = vmatpush2.xpose.msra.mxu0 %v257
    %616 = vmatprep.subr.mxu0 0.0
    %617 = vmatpush2.xpose.msra.mxu0 %v254
    %618 = vmatprep.subr.mxu0 0.0
    %619 = vmatpush2.xpose.msra.mxu0 %v251
    %620 = vmatprep.subr.mxu0 0.0
    %621 = vmatpush2.xpose.msra.mxu0 %v248
    %622 = vmatprep.subr.mxu0 0.0
    %623 = vmatpush2.xpose.msra.mxu0 %v245
    %624 = vmatprep.subr.mxu0 0.0
    %625 = vmatpush2.xpose.msra.mxu0 %v242
    %626 = vmatprep.subr.mxu0 0.0
    %627 = vmatpush2.xpose.msra.mxu0 %v239
    %628 = vmatprep.subr.mxu0 0.0
    %629 = vmatpush2.xpose.msra.mxu0 %v236
    %630 = vmatprep.subr.mxu0 0.0
    %631 = vmatpush2.xpose.msra.mxu0 %v233
    %632 = vmatprep.mubr.f32.mxu0 0.0
    %633 = vmatmul.mubr.f32.gmra.mxu0 %v179
    %v634 = vpop.f32.mrf.mxu0
    %v635 = vadd.f32 %v170, %v634
    %v636 = vpop.f32.mrf.mxu0
    %v637 = vadd.f32 %v170, %v636
    %638 = vmatprep.mubr.f32.mxu0 0.0
    %639 = vmatmul.mubr.f32.gmra.mxu0 %v182
    %v640 = vpop.f32.mrf.mxu0
    %v641 = vadd.f32 %v175, %v640
    %v642 = vpop.f32.mrf.mxu0
    %v643 = vadd.f32 %v175, %v642
    %644 = vdwg.mxu0
    %645 = vmatprep.subr.mxu0 0.0
    %646 = vmatpush1.xpose.msra.mxu0 %v326
    %647 = vmatprep.subr.mxu0 0.0
    %648 = vmatpush1.xpose.msra.mxu0 %v323
    %649 = vmatprep.subr.mxu0 0.0
    %650 = vmatpush1.xpose.msra.mxu0 %v320
    %651 = vmatprep.subr.mxu0 0.0
    %652 = vmatpush1.xpose.msra.mxu0 %v317
    %653 = vmatprep.subr.mxu0 0.0
    %654 = vmatpush1.xpose.msra.mxu0 %v314
    %655 = vmatprep.subr.mxu0 0.0
    %656 = vmatpush1.xpose.msra.mxu0 %v311
    %657 = vmatprep.subr.mxu0 0.0
    %658 = vmatpush1.xpose.msra.mxu0 %v308
    %659 = vmatprep.subr.mxu0 0.0
    %660 = vmatpush1.xpose.msra.mxu0 %v305
    %661 = vmatprep.subr.mxu0 0.0
    %662 = vmatpush1.xpose.msra.mxu0 %v302
    %663 = vmatprep.subr.mxu0 0.0
    %664 = vmatpush1.xpose.msra.mxu0 %v299
    %665 = vmatprep.subr.mxu0 0.0
    %666 = vmatpush1.xpose.msra.mxu0 %v296
    %667 = vmatprep.subr.mxu0 0.0
    %668 = vmatpush1.xpose.msra.mxu0 %v293
    %669 = vmatprep.subr.mxu0 0.0
    %670 = vmatpush1.xpose.msra.mxu0 %v290
    %671 = vmatprep.subr.mxu0 0.0
    %672 = vmatpush1.xpose.msra.mxu0 %v287
    %673 = vmatprep.subr.mxu0 0.0
    %674 = vmatpush1.xpose.msra.mxu0 %v284
    %675 = vmatprep.subr.mxu0 0.0
    %676 = vmatpush1.xpose.msra.mxu0 %v281
    %677 = vmatprep.subr.mxu0 0.0
    %678 = vmatpush2.xpose.msra.mxu0 %v374
    %679 = vmatprep.subr.mxu0 0.0
    %680 = vmatpush2.xpose.msra.mxu0 %v371
    %681 = vmatprep.subr.mxu0 0.0
    %682 = vmatpush2.xpose.msra.mxu0 %v368
    %683 = vmatprep.subr.mxu0 0.0
    %684 = vmatpush2.xpose.msra.mxu0 %v365
    %685 = vmatprep.subr.mxu0 0.0
    %686 = vmatpush2.xpose.msra.mxu0 %v362
    %687 = vmatprep.subr.mxu0 0.0
    %688 = vmatpush2.xpose.msra.mxu0 %v359
    %689 = vmatprep.subr.mxu0 0.0
    %690 = vmatpush2.xpose.msra.mxu0 %v356
    %691 = vmatprep.subr.mxu0 0.0
    %692 = vmatpush2.xpose.msra.mxu0 %v353
    %693 = vmatprep.subr.mxu0 0.0
    %694 = vmatpush2.xpose.msra.mxu0 %v350
    %695 = vmatprep.subr.mxu0 0.0
    %696 = vmatpush2.xpose.msra.mxu0 %v347
    %697 = vmatprep.subr.mxu0 0.0
    %698 = vmatpush2.xpose.msra.mxu0 %v344
    %699 = vmatprep.subr.mxu0 0.0
    %700 = vmatpush2.xpose.msra.mxu0 %v341
    %701 = vmatprep.subr.mxu0 0.0
    %702 = vmatpush2.xpose.msra.mxu0 %v338
    %703 = vmatprep.subr.mxu0 0.0
    %704 = vmatpush2.xpose.msra.mxu0 %v335
    %705 = vmatprep.subr.mxu0 0.0
    %706 = vmatpush2.xpose.msra.mxu0 %v332
    %707 = vmatprep.subr.mxu0 0.0
    %708 = vmatpush2.xpose.msra.mxu0 %v329
    %709 = vmatprep.mubr.f32.mxu0 0.0
    %710 = vmatmul.mubr.f32.gmra.mxu0 %v179
    %v711 = vpop.f32.mrf.mxu0
    %v712 = vadd.f32 %v170, %v711
    %v713 = vpop.f32.mrf.mxu0
    %v714 = vadd.f32 %v170, %v713
    %715 = vmatprep.mubr.f32.mxu0 0.0
    %716 = vmatmul.mubr.f32.gmra.mxu0 %v182
    %v717 = vpop.f32.mrf.mxu0
    %v718 = vadd.f32 %v175, %v717
    %v719 = vpop.f32.mrf.mxu0
    %v720 = vadd.f32 %v175, %v719
    %721 = vdwg.mxu0
    %722 = vmatprep.subr.mxu0 0.0
    %723 = vmatpush1.xpose.msra.mxu0 %v422
    %724 = vmatprep.subr.mxu0 0.0
    %725 = vmatpush1.xpose.msra.mxu0 %v419
    %726 = vmatprep.subr.mxu0 0.0
    %727 = vmatpush1.xpose.msra.mxu0 %v416
    %728 = vmatprep.subr.mxu0 0.0
    %729 = vmatpush1.xpose.msra.mxu0 %v413
    %730 = vmatprep.subr.mxu0 0.0
    %731 = vmatpush1.xpose.msra.mxu0 %v410
    %732 = vmatprep.subr.mxu0 0.0
    %733 = vmatpush1.xpose.msra.mxu0 %v407
    %734 = vmatprep.subr.mxu0 0.0
    %735 = vmatpush1.xpose.msra.mxu0 %v404
    %736 = vmatprep.subr.mxu0 0.0
    %737 = vmatpush1.xpose.msra.mxu0 %v401
    %738 = vmatprep.subr.mxu0 0.0
    %739 = vmatpush1.xpose.msra.mxu0 %v398
    %740 = vmatprep.subr.mxu0 0.0
    %741 = vmatpush1.xpose.msra.mxu0 %v395
    %742 = vmatprep.subr.mxu0 0.0
    %743 = vmatpush1.xpose.msra.mxu0 %v392
    %744 = vmatprep.subr.mxu0 0.0
    %745 = vmatpush1.xpose.msra.mxu0 %v389
    %746 = vmatprep.subr.mxu0 0.0
    %747 = vmatpush1.xpose.msra.mxu0 %v386
    %748 = vmatprep.subr.mxu0 0.0
    %749 = vmatpush1.xpose.msra.mxu0 %v383
    %750 = vmatprep.subr.mxu0 0.0
    %751 = vmatpush1.xpose.msra.mxu0 %v380
    %752 = vmatprep.subr.mxu0 0.0
    %753 = vmatpush1.xpose.msra.mxu0 %v377
    %754 = vmatprep.subr.mxu0 0.0
    %755 = vmatpush2.xpose.msra.mxu0 %v470
    %756 = vmatprep.subr.mxu0 0.0
    %757 = vmatpush2.xpose.msra.mxu0 %v467
    %758 = vmatprep.subr.mxu0 0.0
    %759 = vmatpush2.xpose.msra.mxu0 %v464
    %760 = vmatprep.subr.mxu0 0.0
    %761 = vmatpush2.xpose.msra.mxu0 %v461
    %762 = vmatprep.subr.mxu0 0.0
    %763 = vmatpush2.xpose.msra.mxu0 %v458
    %764 = vmatprep.subr.mxu0 0.0
    %765 = vmatpush2.xpose.msra.mxu0 %v455
    %766 = vmatprep.subr.mxu0 0.0
    %767 = vmatpush2.xpose.msra.mxu0 %v452
    %768 = vmatprep.subr.mxu0 0.0
    %769 = vmatpush2.xpose.msra.mxu0 %v449
    %770 = vmatprep.subr.mxu0 0.0
    %771 = vmatpush2.xpose.msra.mxu0 %v446
    %772 = vmatprep.subr.mxu0 0.0
    %773 = vmatpush2.xpose.msra.mxu0 %v443
    %774 = vmatprep.subr.mxu0 0.0
    %775 = vmatpush2.xpose.msra.mxu0 %v440
    %776 = vmatprep.subr.mxu0 0.0
    %777 = vmatpush2.xpose.msra.mxu0 %v437
    %778 = vmatprep.subr.mxu0 0.0
    %779 = vmatpush2.xpose.msra.mxu0 %v434
    %780 = vmatprep.subr.mxu0 0.0
    %781 = vmatpush2.xpose.msra.mxu0 %v431
    %782 = vmatprep.subr.mxu0 0.0
    %783 = vmatpush2.xpose.msra.mxu0 %v428
    %784 = vmatprep.subr.mxu0 0.0
    %785 = vmatpush2.xpose.msra.mxu0 %v425
    %786 = vmatprep.mubr.f32.mxu0 0.0
    %787 = vmatmul.mubr.f32.gmra.mxu0 %v179
    %v788 = vpop.f32.mrf.mxu0
    %v789 = vadd.f32 %v170, %v788
    %v790 = vpop.f32.mrf.mxu0
    %v791 = vadd.f32 %v170, %v790
    %792 = vmatprep.mubr.f32.mxu0 0.0
    %793 = vmatmul.mubr.f32.gmra.mxu0 %v182
    %v794 = vpop.f32.mrf.mxu0
    %v795 = vadd.f32 %v175, %v794
    %v796 = vpop.f32.mrf.mxu0
    %v797 = vadd.f32 %v175, %v796
    %798 = vdwg.mxu0
    %799 = vmatprep.subr.mxu0 0.0
    %800 = vmatpush1.xpose.msra.mxu0 %v518
    %801 = vmatprep.subr.mxu0 0.0
    %802 = vmatpush1.xpose.msra.mxu0 %v515
    %803 = vmatprep.subr.mxu0 0.0
    %804 = vmatpush1.xpose.msra.mxu0 %v512
    %805 = vmatprep.subr.mxu0 0.0
    %806 = vmatpush1.xpose.msra.mxu0 %v509
    %807 = vmatprep.subr.mxu0 0.0
    %808 = vmatpush1.xpose.msra.mxu0 %v506
    %809 = vmatprep.subr.mxu0 0.0
    %810 = vmatpush1.xpose.msra.mxu0 %v503
    %811 = vmatprep.subr.mxu0 0.0
    %812 = vmatpush1.xpose.msra.mxu0 %v500
    %813 = vmatprep.subr.mxu0 0.0
    %814 = vmatpush1.xpose.msra.mxu0 %v497
    %815 = vmatprep.subr.mxu0 0.0
    %816 = vmatpush1.xpose.msra.mxu0 %v494
    %817 = vmatprep.subr.mxu0 0.0
    %818 = vmatpush1.xpose.msra.mxu0 %v491
    %819 = vmatprep.subr.mxu0 0.0
    %820 = vmatpush1.xpose.msra.mxu0 %v488
    %821 = vmatprep.subr.mxu0 0.0
    %822 = vmatpush1.xpose.msra.mxu0 %v485
    %823 = vmatprep.subr.mxu0 0.0
    %824 = vmatpush1.xpose.msra.mxu0 %v482
    %825 = vmatprep.subr.mxu0 0.0
    %826 = vmatpush1.xpose.msra.mxu0 %v479
    %827 = vmatprep.subr.mxu0 0.0
    %828 = vmatpush1.xpose.msra.mxu0 %v476
    %829 = vmatprep.subr.mxu0 0.0
    %830 = vmatpush1.xpose.msra.mxu0 %v473
    %831 = vmatprep.subr.mxu0 0.0
    %832 = vmatpush2.xpose.msra.mxu0 %v566
    %833 = vmatprep.subr.mxu0 0.0
    %834 = vmatpush2.xpose.msra.mxu0 %v563
    %835 = vmatprep.subr.mxu0 0.0
    %836 = vmatpush2.xpose.msra.mxu0 %v560
    %837 = vmatprep.subr.mxu0 0.0
    %838 = vmatpush2.xpose.msra.mxu0 %v557
    %839 = vmatprep.subr.mxu0 0.0
    %840 = vmatpush2.xpose.msra.mxu0 %v554
    %841 = vmatprep.subr.mxu0 0.0
    %842 = vmatpush2.xpose.msra.mxu0 %v551
    %843 = vmatprep.subr.mxu0 0.0
    %844 = vmatpush2.xpose.msra.mxu0 %v548
    %845 = vmatprep.subr.mxu0 0.0
    %846 = vmatpush2.xpose.msra.mxu0 %v545
    %847 = vmatprep.subr.mxu0 0.0
    %848 = vmatpush2.xpose.msra.mxu0 %v542
    %849 = vmatprep.subr.mxu0 0.0
    %850 = vmatpush2.xpose.msra.mxu0 %v539
    %851 = vmatprep.subr.mxu0 0.0
    %852 = vmatpush2.xpose.msra.mxu0 %v536
    %853 = vmatprep.subr.mxu0 0.0
    %854 = vmatpush2.xpose.msra.mxu0 %v533
    %855 = vmatprep.subr.mxu0 0.0
    %856 = vmatpush2.xpose.msra.mxu0 %v530
    %857 = vmatprep.subr.mxu0 0.0
    %858 = vmatpush2.xpose.msra.mxu0 %v527
    %859 = vmatprep.subr.mxu0 0.0
    %860 = vmatpush2.xpose.msra.mxu0 %v524
    %861 = vmatprep.subr.mxu0 0.0
    %862 = vmatpush2.xpose.msra.mxu0 %v521
    %863 = vmatprep.mubr.f32.mxu0 0.0
    %864 = vmatmul.mubr.f32.gmra.mxu0 %v179
    %v865 = vpop.f32.mrf.mxu0
    %v866 = vadd.f32 %v170, %v865
    %v867 = vpop.f32.mrf.mxu0
    %v868 = vadd.f32 %v170, %v867
    %869 = vmatprep.mubr.f32.mxu0 0.0
    %870 = vmatmul.mubr.f32.gmra.mxu0 %v182
    %v871 = vpop.f32.mrf.mxu0
    %v872 = vadd.f32 %v175, %v871
    %v873 = vpop.f32.mrf.mxu0
    %v874 = vadd.f32 %v175, %v873
    %875 = vdwg.mxu0
    %v876 = vmax.f32 %v635, 0.0
    %v877 = vmax.f32 %v637, 0.0
    %v878 = vmax.f32 %v712, 0.0
    %v879 = vmax.f32 %v714, 0.0
    %v880 = vmax.f32 %v789, 0.0
    %v881 = vmax.f32 %v791, 0.0
    %v882 = vmax.f32 %v866, 0.0
    %v883 = vmax.f32 %v868, 0.0
    %v884 = vmax.f32 %v641, 0.0
    %v885 = vmax.f32 %v643, 0.0
    %v886 = vmax.f32 %v718, 0.0
    %v887 = vmax.f32 %v720, 0.0
    %v888 = vmax.f32 %v795, 0.0
    %v889 = vmax.f32 %v797, 0.0
    %v890 = vmax.f32 %v872, 0.0
    %v891 = vmax.f32 %v874, 0.0
    %893 = vset.pattern.permute.xlu0 0
    %894 = vperm.xlu0 %893, %v163
    %v895 = vpop.permute.xlu0 %894
    %898 = vset.pattern.permute.xlu0 0
    %899 = vperm.xlu0 %898, %v164
    %v900 = vpop.permute.xlu0 %899
    %vm902 = vcmask 130048
    %v904 = vsel %vm902, %v161, 0
    %v907 = vsel %vm902, %v162, 0
    %909 = vmatprep.subr.mxu0 0.0
    %910 = vmatpush1.msra.mxu0 0.0
    %911 = vmatprep.subr.mxu0 0.0
    %912 = vmatpush1.msra.mxu0 0.0
    %913 = vmatprep.subr.mxu0 0.0
    %914 = vmatpush1.msra.mxu0 0.0
    %915 = vmatprep.subr.mxu0 0.0
    %916 = vmatpush1.msra.mxu0 0.0
    %917 = vmatprep.subr.mxu0 0.0
    %918 = vmatpush1.msra.mxu0 0.0
    %919 = vmatprep.subr.mxu0 0.0
    %920 = vmatpush1.msra.mxu0 0.0
    %921 = vmatprep.subr.mxu0 0.0
    %922 = vmatpush1.msra.mxu0 0.0
    %923 = vmatprep.subr.mxu0 0.0
    %924 = vmatpush1.msra.mxu0 0.0
    %925 = vmatprep.subr.mxu0 0.0
    %926 = vmatpush1.msra.mxu0 0.0
    %927 = vmatprep.subr.mxu0 0.0
    %928 = vmatpush1.msra.mxu0 0.0
    %929 = vmatprep.subr.mxu0 0.0
    %930 = vmatpush1.msra.mxu0 0.0
    %931 = vmatprep.subr.mxu0 0.0
    %932 = vmatpush1.msra.mxu0 0.0
    %933 = vmatprep.subr.mxu0 0.0
    %934 = vmatpush1.msra.mxu0 0.0
    %935 = vmatprep.subr.mxu0 0.0
    %936 = vmatpush1.msra.mxu0 0.0
    %937 = vmatprep.subr.mxu0 %v885
    %938 = vmatpush1.msra.mxu0 %v884
    %939 = vmatprep.subr.mxu0 %v877
    %940 = vmatpush1.msra.mxu0 %v876
    %941 = vmatprep.subr.mxu0 0.0
    %942 = vmatpush2.msra.mxu0 0.0
    %943 = vmatprep.subr.mxu0 0.0
    %944 = vmatpush2.msra.mxu0 0.0
    %945 = vmatprep.subr.mxu0 0.0
    %946 = vmatpush2.msra.mxu0 0.0
    %947 = vmatprep.subr.mxu0 0.0
    %948 = vmatpush2.msra.mxu0 0.0
    %949 = vmatprep.subr.mxu0 0.0
    %950 = vmatpush2.msra.mxu0 0.0
    %951 = vmatprep.subr.mxu0 0.0
    %952 = vmatpush2.msra.mxu0 0.0
    %953 = vmatprep.subr.mxu0 0.0
    %954 = vmatpush2.msra.mxu0 0.0
    %955 = vmatprep.subr.mxu0 0.0
    %956 = vmatpush2.msra.mxu0 0.0
    %957 = vmatprep.subr.mxu0 0.0
    %958 = vmatpush2.msra.mxu0 0.0
    %959 = vmatprep.subr.mxu0 0.0
    %960 = vmatpush2.msra.mxu0 0.0
    %961 = vmatprep.subr.mxu0 0.0
    %962 = vmatpush2.msra.mxu0 0.0
    %963 = vmatprep.subr.mxu0 0.0
    %964 = vmatpush2.msra.mxu0 0.0
    %965 = vmatprep.subr.mxu0 0.0
    %966 = vmatpush2.msra.mxu0 0.0
    %967 = vmatprep.subr.mxu0 0.0
    %968 = vmatpush2.msra.mxu0 0.0
    %969 = vmatprep.subr.mxu0 0.0
    %970 = vmatpush2.msra.mxu0 0.0
    %971 = vmatprep.subr.mxu0 0.0
    %972 = vmatpush2.msra.mxu0 0.0
    %973 = vmatprep.mubr.f32.mxu0 0.0
    %974 = vmatmul.mubr.f32.gmra.mxu0 %v904
    %v975 = vpop.f32.mrf.mxu0
    %v976 = vadd.f32 %v895, %v975
    %v977 = vpop.f32.mrf.mxu0
    %v978 = vadd.f32 %v895, %v977
    %979 = vmatprep.mubr.f32.mxu0 0.0
    %980 = vmatmul.mubr.f32.gmra.mxu0 %v907
    %v981 = vpop.f32.mrf.mxu0
    %v982 = vadd.f32 %v900, %v981
    %v983 = vpop.f32.mrf.mxu0
    %v984 = vadd.f32 %v900, %v983
    %985 = vdwg.mxu0
    %986 = vmatprep.subr.mxu0 0.0
    %987 = vmatpush1.msra.mxu0 0.0
    %988 = vmatprep.subr.mxu0 0.0
    %989 = vmatpush1.msra.mxu0 0.0
    %990 = vmatprep.subr.mxu0 0.0
    %991 = vmatpush1.msra.mxu0 0.0
    %992 = vmatprep.subr.mxu0 0.0
    %993 = vmatpush1.msra.mxu0 0.0
    %994 = vmatprep.subr.mxu0 0.0
    %995 = vmatpush1.msra.mxu0 0.0
    %996 = vmatprep.subr.mxu0 0.0
    %997 = vmatpush1.msra.mxu0 0.0
    %998 = vmatprep.subr.mxu0 0.0
    %999 = vmatpush1.msra.mxu0 0.0
    %1000 = vmatprep.subr.mxu0 0.0
    %1001 = vmatpush1.msra.mxu0 0.0
    %1002 = vmatprep.subr.mxu0 0.0
    %1003 = vmatpush1.msra.mxu0 0.0
    %1004 = vmatprep.subr.mxu0 0.0
    %1005 = vmatpush1.msra.mxu0 0.0
    %1006 = vmatprep.subr.mxu0 0.0
    %1007 = vmatpush1.msra.mxu0 0.0
    %1008 = vmatprep.subr.mxu0 0.0
    %1009 = vmatpush1.msra.mxu0 0.0
    %1010 = vmatprep.subr.mxu0 0.0
    %1011 = vmatpush1.msra.mxu0 0.0
    %1012 = vmatprep.subr.mxu0 0.0
    %1013 = vmatpush1.msra.mxu0 0.0
    %1014 = vmatprep.subr.mxu0 %v887
    %1015 = vmatpush1.msra.mxu0 %v886
    %1016 = vmatprep.subr.mxu0 %v879
    %1017 = vmatpush1.msra.mxu0 %v878
    %1018 = vmatprep.subr.mxu0 0.0
    %1019 = vmatpush2.msra.mxu0 0.0
    %1020 = vmatprep.subr.mxu0 0.0
    %1021 = vmatpush2.msra.mxu0 0.0
    %1022 = vmatprep.subr.mxu0 0.0
    %1023 = vmatpush2.msra.mxu0 0.0
    %1024 = vmatprep.subr.mxu0 0.0
    %1025 = vmatpush2.msra.mxu0 0.0
    %1026 = vmatprep.subr.mxu0 0.0
    %1027 = vmatpush2.msra.mxu0 0.0
    %1028 = vmatprep.subr.mxu0 0.0
    %1029 = vmatpush2.msra.mxu0 0.0
    %1030 = vmatprep.subr.mxu0 0.0
    %1031 = vmatpush2.msra.mxu0 0.0
    %1032 = vmatprep.subr.mxu0 0.0
    %1033 = vmatpush2.msra.mxu0 0.0
    %1034 = vmatprep.subr.mxu0 0.0
    %1035 = vmatpush2.msra.mxu0 0.0
    %1036 = vmatprep.subr.mxu0 0.0
    %1037 = vmatpush2.msra.mxu0 0.0
    %1038 = vmatprep.subr.mxu0 0.0
    %1039 = vmatpush2.msra.mxu0 0.0
    %1040 = vmatprep.subr.mxu0 0.0
    %1041 = vmatpush2.msra.mxu0 0.0
    %1042 = vmatprep.subr.mxu0 0.0
    %1043 = vmatpush2.msra.mxu0 0.0
    %1044 = vmatprep.subr.mxu0 0.0
    %1045 = vmatpush2.msra.mxu0 0.0
    %1046 = vmatprep.subr.mxu0 0.0
    %1047 = vmatpush2.msra.mxu0 0.0
    %1048 = vmatprep.subr.mxu0 0.0
    %1049 = vmatpush2.msra.mxu0 0.0
    %1050 = vmatprep.mubr.f32.mxu0 0.0
    %1051 = vmatmul.mubr.f32.gmra.mxu0 %v904
    %v1052 = vpop.f32.mrf.mxu0
    %v1053 = vadd.f32 %v895, %v1052
    %v1054 = vpop.f32.mrf.mxu0
    %v1055 = vadd.f32 %v895, %v1054
    %1056 = vmatprep.mubr.f32.mxu0 0.0
    %1057 = vmatmul.mubr.f32.gmra.mxu0 %v907
    %v1058 = vpop.f32.mrf.mxu0
    %v1059 = vadd.f32 %v900, %v1058
    %v1060 = vpop.f32.mrf.mxu0
    %v1061 = vadd.f32 %v900, %v1060
    %1062 = vdwg.mxu0
    %1063 = vmatprep.subr.mxu0 0.0
    %1064 = vmatpush1.msra.mxu0 0.0
    %1065 = vmatprep.subr.mxu0 0.0
    %1066 = vmatpush1.msra.mxu0 0.0
    %1067 = vmatprep.subr.mxu0 0.0
    %1068 = vmatpush1.msra.mxu0 0.0
    %1069 = vmatprep.subr.mxu0 0.0
    %1070 = vmatpush1.msra.mxu0 0.0
    %1071 = vmatprep.subr.mxu0 0.0
    %1072 = vmatpush1.msra.mxu0 0.0
    %1073 = vmatprep.subr.mxu0 0.0
    %1074 = vmatpush1.msra.mxu0 0.0
    %1075 = vmatprep.subr.mxu0 0.0
    %1076 = vmatpush1.msra.mxu0 0.0
    %1077 = vmatprep.subr.mxu0 0.0
    %1078 = vmatpush1.msra.mxu0 0.0
    %1079 = vmatprep.subr.mxu0 0.0
    %1080 = vmatpush1.msra.mxu0 0.0
    %1081 = vmatprep.subr.mxu0 0.0
    %1082 = vmatpush1.msra.mxu0 0.0
    %1083 = vmatprep.subr.mxu0 0.0
    %1084 = vmatpush1.msra.mxu0 0.0
    %1085 = vmatprep.subr.mxu0 0.0
    %1086 = vmatpush1.msra.mxu0 0.0
    %1087 = vmatprep.subr.mxu0 0.0
    %1088 = vmatpush1.msra.mxu0 0.0
    %1089 = vmatprep.subr.mxu0 0.0
    %1090 = vmatpush1.msra.mxu0 0.0
    %1091 = vmatprep.subr.mxu0 %v889
    %1092 = vmatpush1.msra.mxu0 %v888
    %1093 = vmatprep.subr.mxu0 %v881
    %1094 = vmatpush1.msra.mxu0 %v880
    %1095 = vmatprep.subr.mxu0 0.0
    %1096 = vmatpush2.msra.mxu0 0.0
    %1097 = vmatprep.subr.mxu0 0.0
    %1098 = vmatpush2.msra.mxu0 0.0
    %1099 = vmatprep.subr.mxu0 0.0
    %1100 = vmatpush2.msra.mxu0 0.0
    %1101 = vmatprep.subr.mxu0 0.0
    %1102 = vmatpush2.msra.mxu0 0.0
    %1103 = vmatprep.subr.mxu0 0.0
    %1104 = vmatpush2.msra.mxu0 0.0
    %1105 = vmatprep.subr.mxu0 0.0
    %1106 = vmatpush2.msra.mxu0 0.0
    %1107 = vmatprep.subr.mxu0 0.0
    %1108 = vmatpush2.msra.mxu0 0.0
    %1109 = vmatprep.subr.mxu0 0.0
    %1110 = vmatpush2.msra.mxu0 0.0
    %1111 = vmatprep.subr.mxu0 0.0
    %1112 = vmatpush2.msra.mxu0 0.0
    %1113 = vmatprep.subr.mxu0 0.0
    %1114 = vmatpush2.msra.mxu0 0.0
    %1115 = vmatprep.subr.mxu0 0.0
    %1116 = vmatpush2.msra.mxu0 0.0
    %1117 = vmatprep.subr.mxu0 0.0
    %1118 = vmatpush2.msra.mxu0 0.0
    %1119 = vmatprep.subr.mxu0 0.0
    %1120 = vmatpush2.msra.mxu0 0.0
    %1121 = vmatprep.subr.mxu0 0.0
    %1122 = vmatpush2.msra.mxu0 0.0
    %1123 = vmatprep.subr.mxu0 0.0
    %1124 = vmatpush2.msra.mxu0 0.0
    %1125 = vmatprep.subr.mxu0 0.0
    %1126 = vmatpush2.msra.mxu0 0.0
    %1127 = vmatprep.mubr.f32.mxu0 0.0
    %1128 = vmatmul.mubr.f32.gmra.mxu0 %v904
    %v1129 = vpop.f32.mrf.mxu0
    %v1130 = vadd.f32 %v895, %v1129
    %v1131 = vpop.f32.mrf.mxu0
    %v1132 = vadd.f32 %v895, %v1131
    %1133 = vmatprep.mubr.f32.mxu0 0.0
    %1134 = vmatmul.mubr.f32.gmra.mxu0 %v907
    %v1135 = vpop.f32.mrf.mxu0
    %v1136 = vadd.f32 %v900, %v1135
    %v1137 = vpop.f32.mrf.mxu0
    %v1138 = vadd.f32 %v900, %v1137
    %1139 = vdwg.mxu0
    %1140 = vmatprep.subr.mxu0 0.0
    %1141 = vmatpush1.msra.mxu0 0.0
    %1142 = vmatprep.subr.mxu0 0.0
    %1143 = vmatpush1.msra.mxu0 0.0
    %1144 = vmatprep.subr.mxu0 0.0
    %1145 = vmatpush1.msra.mxu0 0.0
    %1146 = vmatprep.subr.mxu0 0.0
    %1147 = vmatpush1.msra.mxu0 0.0
    %1148 = vmatprep.subr.mxu0 0.0
    %1149 = vmatpush1.msra.mxu0 0.0
    %1150 = vmatprep.subr.mxu0 0.0
    %1151 = vmatpush1.msra.mxu0 0.0
    %1152 = vmatprep.subr.mxu0 0.0
    %1153 = vmatpush1.msra.mxu0 0.0
    %1154 = vmatprep.subr.mxu0 0.0
    %1155 = vmatpush1.msra.mxu0 0.0
    %1156 = vmatprep.subr.mxu0 0.0
    %1157 = vmatpush1.msra.mxu0 0.0
    %1158 = vmatprep.subr.mxu0 0.0
    %1159 = vmatpush1.msra.mxu0 0.0
    %1160 = vmatprep.subr.mxu0 0.0
    %1161 = vmatpush1.msra.mxu0 0.0
    %1162 = vmatprep.subr.mxu0 0.0
    %1163 = vmatpush1.msra.mxu0 0.0
    %1164 = vmatprep.subr.mxu0 0.0
    %1165 = vmatpush1.msra.mxu0 0.0
    %1166 = vmatprep.subr.mxu0 0.0
    %1167 = vmatpush1.msra.mxu0 0.0
    %1168 = vmatprep.subr.mxu0 %v891
    %1169 = vmatpush1.msra.mxu0 %v890
    %1170 = vmatprep.subr.mxu0 %v883
    %1171 = vmatpush1.msra.mxu0 %v882
    %1172 = vmatprep.subr.mxu0 0.0
    %1173 = vmatpush2.msra.mxu0 0.0
    %1174 = vmatprep.subr.mxu0 0.0
    %1175 = vmatpush2.msra.mxu0 0.0
    %1176 = vmatprep.subr.mxu0 0.0
    %1177 = vmatpush2.msra.mxu0 0.0
    %1178 = vmatprep.subr.mxu0 0.0
    %1179 = vmatpush2.msra.mxu0 0.0
    %1180 = vmatprep.subr.mxu0 0.0
    %1181 = vmatpush2.msra.mxu0 0.0
    %1182 = vmatprep.subr.mxu0 0.0
    %1183 = vmatpush2.msra.mxu0 0.0
    %1184 = vmatprep.subr.mxu0 0.0
    %1185 = vmatpush2.msra.mxu0 0.0
    %1186 = vmatprep.subr.mxu0 0.0
    %1187 = vmatpush2.msra.mxu0 0.0
    %1188 = vmatprep.subr.mxu0 0.0
    %1189 = vmatpush2.msra.mxu0 0.0
    %1190 = vmatprep.subr.mxu0 0.0
    %1191 = vmatpush2.msra.mxu0 0.0
    %1192 = vmatprep.subr.mxu0 0.0
    %1193 = vmatpush2.msra.mxu0 0.0
    %1194 = vmatprep.subr.mxu0 0.0
    %1195 = vmatpush2.msra.mxu0 0.0
    %1196 = vmatprep.subr.mxu0 0.0
    %1197 = vmatpush2.msra.mxu0 0.0
    %1198 = vmatprep.subr.mxu0 0.0
    %1199 = vmatpush2.msra.mxu0 0.0
    %1200 = vmatprep.subr.mxu0 0.0
    %1201 = vmatpush2.msra.mxu0 0.0
    %1202 = vmatprep.subr.mxu0 0.0
    %1203 = vmatpush2.msra.mxu0 0.0
    %1204 = vmatprep.mubr.f32.mxu0 0.0
    %1205 = vmatmul.mubr.f32.gmra.mxu0 %v904
    %v1206 = vpop.f32.mrf.mxu0
    %v1207 = vadd.f32 %v895, %v1206
    %v1208 = vpop.f32.mrf.mxu0
    %v1209 = vadd.f32 %v895, %v1208
    %1210 = vmatprep.mubr.f32.mxu0 0.0
    %1211 = vmatmul.mubr.f32.gmra.mxu0 %v907
    %v1212 = vpop.f32.mrf.mxu0
    %v1213 = vadd.f32 %v900, %v1212
    %v1214 = vpop.f32.mrf.mxu0
    %v1215 = vadd.f32 %v900, %v1214
    %1216 = vdwg.mxu0
    %v1217 = vmax.f32 %v976, 0.0
    %v1218 = vmax.f32 %v978, 0.0
    %v1219 = vmax.f32 %v1053, 0.0
    %v1220 = vmax.f32 %v1055, 0.0
    %v1221 = vmax.f32 %v1130, 0.0
    %v1222 = vmax.f32 %v1132, 0.0
    %v1223 = vmax.f32 %v1207, 0.0
    %v1224 = vmax.f32 %v1209, 0.0
    %v1225 = vmax.f32 %v982, 0.0
    %v1226 = vmax.f32 %v984, 0.0
    %v1227 = vmax.f32 %v1059, 0.0
    %v1228 = vmax.f32 %v1061, 0.0
    %v1229 = vmax.f32 %v1136, 0.0
    %v1230 = vmax.f32 %v1138, 0.0
    %v1231 = vmax.f32 %v1213, 0.0
    %v1232 = vmax.f32 %v1215, 0.0
    %1234 = vset.pattern.permute.xlu0 0
    %1235 = vperm.xlu0 %1234, %v166
    %v1236 = vpop.permute.xlu0 %1235
    %v1238 = vlaneseq
    %v1239 = vshrl.u32 %v1238, 7
    %v1240 = vsub.s32 0, %v1239
    %v1241 = vrot.slane %v1236, %v1240
    %v1243 = vsel %vm902, %v165, 0
    %1245 = vmatprep.subr.mxu0 0.0
    %1246 = vmatpush1.msra.mxu0 0.0
    %1247 = vmatprep.subr.mxu0 0.0
    %1248 = vmatpush1.msra.mxu0 0.0
    %1249 = vmatprep.subr.mxu0 0.0
    %1250 = vmatpush1.msra.mxu0 0.0
    %1251 = vmatprep.subr.mxu0 0.0
    %1252 = vmatpush1.msra.mxu0 0.0
    %1253 = vmatprep.subr.mxu0 0.0
    %1254 = vmatpush1.msra.mxu0 0.0
    %1255 = vmatprep.subr.mxu0 0.0
    %1256 = vmatpush1.msra.mxu0 0.0
    %1257 = vmatprep.subr.mxu0 0.0
    %1258 = vmatpush1.msra.mxu0 0.0
    %1259 = vmatprep.subr.mxu0 0.0
    %1260 = vmatpush1.msra.mxu0 0.0
    %1261 = vmatprep.subr.mxu0 0.0
    %1262 = vmatpush1.msra.mxu0 0.0
    %1263 = vmatprep.subr.mxu0 0.0
    %1264 = vmatpush1.msra.mxu0 0.0
    %1265 = vmatprep.subr.mxu0 0.0
    %1266 = vmatpush1.msra.mxu0 0.0
    %1267 = vmatprep.subr.mxu0 0.0
    %1268 = vmatpush1.msra.mxu0 0.0
    %1269 = vmatprep.subr.mxu0 0.0
    %1270 = vmatpush1.msra.mxu0 0.0
    %1271 = vmatprep.subr.mxu0 0.0
    %1272 = vmatpush1.msra.mxu0 0.0
    %1273 = vmatprep.subr.mxu0 %v1226
    %1274 = vmatpush1.msra.mxu0 %v1225
    %1275 = vmatprep.subr.mxu0 %v1218
    %1276 = vmatpush1.msra.mxu0 %v1217
    %1277 = vmatprep.subr.mxu0 0.0
    %1278 = vmatpush2.msra.mxu0 0.0
    %1279 = vmatprep.subr.mxu0 0.0
    %1280 = vmatpush2.msra.mxu0 0.0
    %1281 = vmatprep.subr.mxu0 0.0
    %1282 = vmatpush2.msra.mxu0 0.0
    %1283 = vmatprep.subr.mxu0 0.0
    %1284 = vmatpush2.msra.mxu0 0.0
    %1285 = vmatprep.subr.mxu0 0.0
    %1286 = vmatpush2.msra.mxu0 0.0
    %1287 = vmatprep.subr.mxu0 0.0
    %1288 = vmatpush2.msra.mxu0 0.0
    %1289 = vmatprep.subr.mxu0 0.0
    %1290 = vmatpush2.msra.mxu0 0.0
    %1291 = vmatprep.subr.mxu0 0.0
    %1292 = vmatpush2.msra.mxu0 0.0
    %1293 = vmatprep.subr.mxu0 0.0
    %1294 = vmatpush2.msra.mxu0 0.0
    %1295 = vmatprep.subr.mxu0 0.0
    %1296 = vmatpush2.msra.mxu0 0.0
    %1297 = vmatprep.subr.mxu0 0.0
    %1298 = vmatpush2.msra.mxu0 0.0
    %1299 = vmatprep.subr.mxu0 0.0
    %1300 = vmatpush2.msra.mxu0 0.0
    %1301 = vmatprep.subr.mxu0 0.0
    %1302 = vmatpush2.msra.mxu0 0.0
    %1303 = vmatprep.subr.mxu0 0.0
    %1304 = vmatpush2.msra.mxu0 0.0
    %1305 = vmatprep.subr.mxu0 0.0
    %1306 = vmatpush2.msra.mxu0 0.0
    %1307 = vmatprep.subr.mxu0 0.0
    %1308 = vmatpush2.msra.mxu0 0.0
    %1309 = vmatprep.mubr.f32.mxu0 0.0
    %1310 = vmatmul.mubr.f32.gmra.mxu0 %v1243
    %v1311 = vpop.f32.mrf.mxu0
    %v1312 = vadd.f32 %v1241, %v1311
    %v1313 = vpop.f32.mrf.mxu0
    %v1314 = vadd.f32 %v1241, %v1313
    %1315 = vdwg.mxu0
    %1316 = vmatprep.subr.mxu0 0.0
    %1317 = vmatpush1.msra.mxu0 0.0
    %1318 = vmatprep.subr.mxu0 0.0
    %1319 = vmatpush1.msra.mxu0 0.0
    %1320 = vmatprep.subr.mxu0 0.0
    %1321 = vmatpush1.msra.mxu0 0.0
    %1322 = vmatprep.subr.mxu0 0.0
    %1323 = vmatpush1.msra.mxu0 0.0
    %1324 = vmatprep.subr.mxu0 0.0
    %1325 = vmatpush1.msra.mxu0 0.0
    %1326 = vmatprep.subr.mxu0 0.0
    %1327 = vmatpush1.msra.mxu0 0.0
    %1328 = vmatprep.subr.mxu0 0.0
    %1329 = vmatpush1.msra.mxu0 0.0
    %1330 = vmatprep.subr.mxu0 0.0
    %1331 = vmatpush1.msra.mxu0 0.0
    %1332 = vmatprep.subr.mxu0 0.0
    %1333 = vmatpush1.msra.mxu0 0.0
    %1334 = vmatprep.subr.mxu0 0.0
    %1335 = vmatpush1.msra.mxu0 0.0
    %1336 = vmatprep.subr.mxu0 0.0
    %1337 = vmatpush1.msra.mxu0 0.0
    %1338 = vmatprep.subr.mxu0 0.0
    %1339 = vmatpush1.msra.mxu0 0.0
    %1340 = vmatprep.subr.mxu0 0.0
    %1341 = vmatpush1.msra.mxu0 0.0
    %1342 = vmatprep.subr.mxu0 0.0
    %1343 = vmatpush1.msra.mxu0 0.0
    %1344 = vmatprep.subr.mxu0 %v1228
    %1345 = vmatpush1.msra.mxu0 %v1227
    %1346 = vmatprep.subr.mxu0 %v1220
    %1347 = vmatpush1.msra.mxu0 %v1219
    %1348 = vmatprep.subr.mxu0 0.0
    %1349 = vmatpush2.msra.mxu0 0.0
    %1350 = vmatprep.subr.mxu0 0.0
    %1351 = vmatpush2.msra.mxu0 0.0
    %1352 = vmatprep.subr.mxu0 0.0
    %1353 = vmatpush2.msra.mxu0 0.0
    %1354 = vmatprep.subr.mxu0 0.0
    %1355 = vmatpush2.msra.mxu0 0.0
    %1356 = vmatprep.subr.mxu0 0.0
    %1357 = vmatpush2.msra.mxu0 0.0
    %1358 = vmatprep.subr.mxu0 0.0
    %1359 = vmatpush2.msra.mxu0 0.0
    %1360 = vmatprep.subr.mxu0 0.0
    %1361 = vmatpush2.msra.mxu0 0.0
    %1362 = vmatprep.subr.mxu0 0.0
    %1363 = vmatpush2.msra.mxu0 0.0
    %1364 = vmatprep.subr.mxu0 0.0
    %1365 = vmatpush2.msra.mxu0 0.0
    %1366 = vmatprep.subr.mxu0 0.0
    %1367 = vmatpush2.msra.mxu0 0.0
    %1368 = vmatprep.subr.mxu0 0.0
    %1369 = vmatpush2.msra.mxu0 0.0
    %1370 = vmatprep.subr.mxu0 0.0
    %1371 = vmatpush2.msra.mxu0 0.0
    %1372 = vmatprep.subr.mxu0 0.0
    %1373 = vmatpush2.msra.mxu0 0.0
    %1374 = vmatprep.subr.mxu0 0.0
    %1375 = vmatpush2.msra.mxu0 0.0
    %1376 = vmatprep.subr.mxu0 0.0
    %1377 = vmatpush2.msra.mxu0 0.0
    %1378 = vmatprep.subr.mxu0 0.0
    %1379 = vmatpush2.msra.mxu0 0.0
    %1380 = vmatprep.mubr.f32.mxu0 0.0
    %1381 = vmatmul.mubr.f32.gmra.mxu0 %v1243
    %v1382 = vpop.f32.mrf.mxu0
    %v1383 = vadd.f32 %v1241, %v1382
    %v1384 = vpop.f32.mrf.mxu0
    %v1385 = vadd.f32 %v1241, %v1384
    %1386 = vdwg.mxu0
    %1387 = vmatprep.subr.mxu0 0.0
    %1388 = vmatpush1.msra.mxu0 0.0
    %1389 = vmatprep.subr.mxu0 0.0
    %1390 = vmatpush1.msra.mxu0 0.0
    %1391 = vmatprep.subr.mxu0 0.0
    %1392 = vmatpush1.msra.mxu0 0.0
    %1393 = vmatprep.subr.mxu0 0.0
    %1394 = vmatpush1.msra.mxu0 0.0
    %1395 = vmatprep.subr.mxu0 0.0
    %1396 = vmatpush1.msra.mxu0 0.0
    %1397 = vmatprep.subr.mxu0 0.0
    %1398 = vmatpush1.msra.mxu0 0.0
    %1399 = vmatprep.subr.mxu0 0.0
    %1400 = vmatpush1.msra.mxu0 0.0
    %1401 = vmatprep.subr.mxu0 0.0
    %1402 = vmatpush1.msra.mxu0 0.0
    %1403 = vmatprep.subr.mxu0 0.0
    %1404 = vmatpush1.msra.mxu0 0.0
    %1405 = vmatprep.subr.mxu0 0.0
    %1406 = vmatpush1.msra.mxu0 0.0
    %1407 = vmatprep.subr.mxu0 0.0
    %1408 = vmatpush1.msra.mxu0 0.0
    %1409 = vmatprep.subr.mxu0 0.0
    %1410 = vmatpush1.msra.mxu0 0.0
    %1411 = vmatprep.subr.mxu0 0.0
    %1412 = vmatpush1.msra.mxu0 0.0
    %1413 = vmatprep.subr.mxu0 0.0
    %1414 = vmatpush1.msra.mxu0 0.0
    %1415 = vmatprep.subr.mxu0 %v1230
    %1416 = vmatpush1.msra.mxu0 %v1229
    %1417 = vmatprep.subr.mxu0 %v1222
    %1418 = vmatpush1.msra.mxu0 %v1221
    %1419 = vmatprep.subr.mxu0 0.0
    %1420 = vmatpush2.msra.mxu0 0.0
    %1421 = vmatprep.subr.mxu0 0.0
    %1422 = vmatpush2.msra.mxu0 0.0
    %1423 = vmatprep.subr.mxu0 0.0
    %1424 = vmatpush2.msra.mxu0 0.0
    %1425 = vmatprep.subr.mxu0 0.0
    %1426 = vmatpush2.msra.mxu0 0.0
    %1427 = vmatprep.subr.mxu0 0.0
    %1428 = vmatpush2.msra.mxu0 0.0
    %1429 = vmatprep.subr.mxu0 0.0
    %1430 = vmatpush2.msra.mxu0 0.0
    %1431 = vmatprep.subr.mxu0 0.0
    %1432 = vmatpush2.msra.mxu0 0.0
    %1433 = vmatprep.subr.mxu0 0.0
    %1434 = vmatpush2.msra.mxu0 0.0
    %1435 = vmatprep.subr.mxu0 0.0
    %1436 = vmatpush2.msra.mxu0 0.0
    %1437 = vmatprep.subr.mxu0 0.0
    %1438 = vmatpush2.msra.mxu0 0.0
    %1439 = vmatprep.subr.mxu0 0.0
    %1440 = vmatpush2.msra.mxu0 0.0
    %1441 = vmatprep.subr.mxu0 0.0
    %1442 = vmatpush2.msra.mxu0 0.0
    %1443 = vmatprep.subr.mxu0 0.0
    %1444 = vmatpush2.msra.mxu0 0.0
    %1445 = vmatprep.subr.mxu0 0.0
    %1446 = vmatpush2.msra.mxu0 0.0
    %1447 = vmatprep.subr.mxu0 0.0
    %1448 = vmatpush2.msra.mxu0 0.0
    %1449 = vmatprep.subr.mxu0 0.0
    %1450 = vmatpush2.msra.mxu0 0.0
    %1451 = vmatprep.mubr.f32.mxu0 0.0
    %1452 = vmatmul.mubr.f32.gmra.mxu0 %v1243
    %v1453 = vpop.f32.mrf.mxu0
    %v1454 = vadd.f32 %v1241, %v1453
    %v1455 = vpop.f32.mrf.mxu0
    %v1456 = vadd.f32 %v1241, %v1455
    %1457 = vdwg.mxu0
    %1458 = vmatprep.subr.mxu0 0.0
    %1459 = vmatpush1.msra.mxu0 0.0
    %1460 = vmatprep.subr.mxu0 0.0
    %1461 = vmatpush1.msra.mxu0 0.0
    %1462 = vmatprep.subr.mxu0 0.0
    %1463 = vmatpush1.msra.mxu0 0.0
    %1464 = vmatprep.subr.mxu0 0.0
    %1465 = vmatpush1.msra.mxu0 0.0
    %1466 = vmatprep.subr.mxu0 0.0
    %1467 = vmatpush1.msra.mxu0 0.0
    %1468 = vmatprep.subr.mxu0 0.0
    %1469 = vmatpush1.msra.mxu0 0.0
    %1470 = vmatprep.subr.mxu0 0.0
    %1471 = vmatpush1.msra.mxu0 0.0
    %1472 = vmatprep.subr.mxu0 0.0
    %1473 = vmatpush1.msra.mxu0 0.0
    %1474 = vmatprep.subr.mxu0 0.0
    %1475 = vmatpush1.msra.mxu0 0.0
    %1476 = vmatprep.subr.mxu0 0.0
    %1477 = vmatpush1.msra.mxu0 0.0
    %1478 = vmatprep.subr.mxu0 0.0
    %1479 = vmatpush1.msra.mxu0 0.0
    %1480 = vmatprep.subr.mxu0 0.0
    %1481 = vmatpush1.msra.mxu0 0.0
    %1482 = vmatprep.subr.mxu0 0.0
    %1483 = vmatpush1.msra.mxu0 0.0
    %1484 = vmatprep.subr.mxu0 0.0
    %1485 = vmatpush1.msra.mxu0 0.0
    %1486 = vmatprep.subr.mxu0 %v1232
    %1487 = vmatpush1.msra.mxu0 %v1231
    %1488 = vmatprep.subr.mxu0 %v1224
    %1489 = vmatpush1.msra.mxu0 %v1223
    %1490 = vmatprep.subr.mxu0 0.0
    %1491 = vmatpush2.msra.mxu0 0.0
    %1492 = vmatprep.subr.mxu0 0.0
    %1493 = vmatpush2.msra.mxu0 0.0
    %1494 = vmatprep.subr.mxu0 0.0
    %1495 = vmatpush2.msra.mxu0 0.0
    %1496 = vmatprep.subr.mxu0 0.0
    %1497 = vmatpush2.msra.mxu0 0.0
    %1498 = vmatprep.subr.mxu0 0.0
    %1499 = vmatpush2.msra.mxu0 0.0
    %1500 = vmatprep.subr.mxu0 0.0
    %1501 = vmatpush2.msra.mxu0 0.0
    %1502 = vmatprep.subr.mxu0 0.0
    %1503 = vmatpush2.msra.mxu0 0.0
    %1504 = vmatprep.subr.mxu0 0.0
    %1505 = vmatpush2.msra.mxu0 0.0
    %1506 = vmatprep.subr.mxu0 0.0
    %1507 = vmatpush2.msra.mxu0 0.0
    %1508 = vmatprep.subr.mxu0 0.0
    %1509 = vmatpush2.msra.mxu0 0.0
    %1510 = vmatprep.subr.mxu0 0.0
    %1511 = vmatpush2.msra.mxu0 0.0
    %1512 = vmatprep.subr.mxu0 0.0
    %1513 = vmatpush2.msra.mxu0 0.0
    %1514 = vmatprep.subr.mxu0 0.0
    %1515 = vmatpush2.msra.mxu0 0.0
    %1516 = vmatprep.subr.mxu0 0.0
    %1517 = vmatpush2.msra.mxu0 0.0
    %1518 = vmatprep.subr.mxu0 0.0
    %1519 = vmatpush2.msra.mxu0 0.0
    %1520 = vmatprep.subr.mxu0 0.0
    %1521 = vmatpush2.msra.mxu0 0.0
    %1522 = vmatprep.mubr.f32.mxu0 0.0
    %1523 = vmatmul.mubr.f32.gmra.mxu0 %v1243
    %v1524 = vpop.f32.mrf.mxu0
    %v1525 = vadd.f32 %v1241, %v1524
    %v1526 = vpop.f32.mrf.mxu0
    %v1527 = vadd.f32 %v1241, %v1526
    %1528 = vdwg.mxu0
    %v1529 = vxor.u32 %v1312, 2147483648
    %v1530 = vxor.u32 %v1314, 2147483648
    %v1531 = vxor.u32 %v1383, 2147483648
    %v1532 = vxor.u32 %v1385, 2147483648
    %v1533 = vxor.u32 %v1454, 2147483648
    %v1534 = vxor.u32 %v1456, 2147483648
    %v1535 = vxor.u32 %v1525, 2147483648
    %v1536 = vxor.u32 %v1527, 2147483648
    %v1537 = vmul.f32 %v1529, 1.442695
    %v1538 = vpow.pop %v1537
    %v1539 = vmul.f32 %v1530, 1.442695
    %v1540 = vpow.pop %v1539
    %v1541 = vmul.f32 %v1531, 1.442695
    %v1542 = vpow.pop %v1541
    %v1543 = vmul.f32 %v1532, 1.442695
    %v1544 = vpow.pop %v1543
    %v1545 = vmul.f32 %v1533, 1.442695
    %v1546 = vpow.pop %v1545
    %v1547 = vmul.f32 %v1534, 1.442695
    %v1548 = vpow.pop %v1547
    %v1549 = vmul.f32 %v1535, 1.442695
    %v1550 = vpow.pop %v1549
    %v1551 = vmul.f32 %v1536, 1.442695
    %v1552 = vpow.pop %v1551
    %v1553 = vadd.f32 %v1538, 1.0
    %v1554 = vadd.f32 %v1540, 1.0
    %v1555 = vadd.f32 %v1542, 1.0
    %v1556 = vadd.f32 %v1544, 1.0
    %v1557 = vadd.f32 %v1546, 1.0
    %v1558 = vadd.f32 %v1548, 1.0
    %v1559 = vadd.f32 %v1550, 1.0
    %v1560 = vadd.f32 %v1552, 1.0
    %v1561 = vrcp.pop %v1553
    %v1562 = vmul.f32 1.0, %v1561
    %v1563 = vrcp.pop %v1554
    %v1564 = vmul.f32 1.0, %v1563
    %v1565 = vrcp.pop %v1555
    %v1566 = vmul.f32 1.0, %v1565
    %v1567 = vrcp.pop %v1556
    %v1568 = vmul.f32 1.0, %v1567
    %v1569 = vrcp.pop %v1557
    %v1570 = vmul.f32 1.0, %v1569
    %v1571 = vrcp.pop %v1558
    %v1572 = vmul.f32 1.0, %v1571
    %v1573 = vrcp.pop %v1559
    %v1574 = vmul.f32 1.0, %v1573
    %v1575 = vrcp.pop %v1560
    %v1576 = vmul.f32 1.0, %v1575
    %v1585 = vcombine.low %v1562, %v1564
    %v1586 = vcombine.low %v1566, %v1568
    %v1587 = vcombine.low %v1570, %v1572
    %v1588 = vcombine.low %v1574, %v1576
    %v1590 = vunpack.c.l.s4 1966171168
    %v1591 = vunpack.c.0.s8 %v1590
    %v1592 = vlaneseq
    %v1593 = vshrl.u32 %v1592, 7
    %v1594 = vsub.s32 %v1591, %v1593
    %v1595 = vrot.slane %v1585, %v1594
    %v1597 = vunpack.c.l.s4 1966171168
    %v1598 = vunpack.c.0.s8 %v1597
    %v1599 = vlaneseq
    %v1600 = vshrl.u32 %v1599, 7
    %v1601 = vsub.s32 %v1598, %v1600
    %v1602 = vrot.slane %v1586, %v1601
    %v1604 = vunpack.c.l.s4 1966171168
    %v1605 = vunpack.c.0.s8 %v1604
    %v1606 = vlaneseq
    %v1607 = vshrl.u32 %v1606, 7
    %v1608 = vsub.s32 %v1605, %v1607
    %v1609 = vrot.slane %v1587, %v1608
    %v1611 = vunpack.c.l.s4 1966171168
    %v1612 = vunpack.c.0.s8 %v1611
    %v1613 = vlaneseq
    %v1614 = vshrl.u32 %v1613, 7
    %v1615 = vsub.s32 %v1612, %v1614
    %v1616 = vrot.slane %v1588, %v1615
    %v1617 = vcombine.low %v1595, %v1602
    %v1618 = vcombine.low %v1609, %v1616
    %v1620 = vunpack.c.l.s4 1966171168
    %v1621 = vunpack.c.0.s8 %v1620
    %v1622 = vlaneseq
    %v1623 = vshrl.u32 %v1622, 7
    %v1624 = vsub.s32 %v1621, %v1623
    %v1625 = vrot.slane %v1617, %v1624
    %v1627 = vunpack.c.l.s4 1966171168
    %v1628 = vunpack.c.0.s8 %v1627
    %v1629 = vlaneseq
    %v1630 = vshrl.u32 %v1629, 7
    %v1631 = vsub.s32 %v1628, %v1630
    %v1632 = vrot.slane %v1618, %v1631
    %v1633 = vcombine.low %v1625, %v1632
    %1635 = vst [vmem:[#allocation3] sm:$0xff] %v1633
    // Predicated region
    $region30: #{tpu_custom_call.1} parent=1 // pred_check
      _
    $region31: #{tpu_custom_call.1} parent=1 // pred_check_branch
      %1637 = sbr.rel (0) target = $region33
    $region32: #{tpu_custom_call.1} parent=1 // pred_region
      %s1639 = ssub.s32 128, 128
      %1640 = vsyncadd [#allocation4], %s1639
      %s1642 = sshll.u32 [#allocation3], 4
      %s1643 = int_to_ptr.vmem [resolvable:$true] %s1642
      %1645 = dma.vmem_to_hbm [thread:$0]  %s1643, 128, %s7, [#allocation4]
    $region33: #{tpu_custom_call.1} parent=1 // pred_fallthru
      _
    // Predicated region
    $region34: #{tpu_custom_call.1} parent=1 // pred_check
      _
    $region35: #{tpu_custom_call.1} parent=1 // pred_check_branch
      %1647 = sbr.rel (0) target = $region37
    $region36: #{tpu_custom_call.1} parent=1 // pred_region
      %1648 = dma.done [#allocation4], 128
    $region37: #{tpu_custom_call.1} parent=1 // pred_fallthru
      _
    %1649 = vsyncpa [#allocation4], 1

</llo_original>
